<compile_context>
chip_gen: v6e
topology: v6e:2x2x1
jax: 0.10.0
libtpu: 0.0.40
codegen_flags: <defaults>
</compile_context>

<pallas_src>
import functools
from typing import Any, NamedTuple, Tuple

import jax
import jax.numpy as jnp
from jax.experimental import pallas as pl
from jax.experimental.pallas import tpu as pltpu


def _round_up(x: int, m: int) -> int:
    return (x + m - 1) // m * m


def _sublane_multiple(dtype) -> int:
    # 8 sublanes of 32-bit; sub-32-bit dtypes pack along sublanes.
    return max(8, 32 // jnp.dtype(dtype).itemsize)


class PreparedActorParams(NamedTuple):
    flat: Tuple[Any, ...]        # (w0, b0, w1, b1, ...) padded & cast
    obs_size: int
    act_size: int
    in_dims: Tuple[int, ...]     # per-layer (padded) input widths
    out_dims: Tuple[int, ...]    # per-layer padded output widths (x128)
    compute_dtype: Any


def prepare_params(params, compute_dtype=jnp.float32) -> PreparedActorParams:
    """Pad/cast the [(W:(in,out), b:(1,out)), ...] list once to kernel layout.

    Hidden/output feature dims are zero-padded to multiples of 128 (lane-dense
    MXU tiles; exact because padded weight rows/cols and biases are zero). The
    first layer's input dim stays at the true obs_size so obs needs no feature
    padding. Weights are cast to compute_dtype (MXU input dtype); biases stay
    f32 (added to the f32 accumulator).
    """
    compute_dtype = jnp.dtype(compute_dtype)
    obs_size = params[0][0].shape[0]
    act_size = params[-1][0].shape[1]
    out_dims = tuple(_round_up(w.shape[1], 128) for w, _ in params)
    in_dims = (obs_size,) + out_dims[:-1]

    flat = []
    for i, (w, b) in enumerate(params):
        w_pad = jnp.pad(w, ((0, in_dims[i] - w.shape[0]),
                            (0, out_dims[i] - w.shape[1])))
        b_pad = jnp.pad(b, ((0, 0), (0, out_dims[i] - b.shape[1])))
        flat.append(w_pad.astype(compute_dtype))
        flat.append(b_pad.astype(jnp.float32))
    return PreparedActorParams(tuple(flat), obs_size, act_size, in_dims,
                               out_dims, compute_dtype)


def _mlp_kernel(n_layers, *refs):
    """Fused MLP forward for one batch tile.

    refs = (x_ref, w0, b0, ..., w{n-1}, b{n-1}, o_ref). x is (TB, obs_size) in
    the input dtype; weights (in_i, out_i) in the compute dtype; biases
    (1, out_i) f32. Matmuls accumulate in f32; activations are cast to the
    weight dtype right before each MXU op so the MXU sees its native input
    dtype; ReLU/Tanh run in f32 on VPU/EUP.
    """
    x_ref = refs[0]
    o_ref = refs[-1]
    h = x_ref[...]
    for i in range(n_layers):
        w = refs[1 + 2 * i][...]
        b = refs[2 + 2 * i][...]
        acc = jnp.dot(h.astype(w.dtype), w, preferred_element_type=jnp.float32) + b
        h = jnp.maximum(acc, 0.0) if i < n_layers - 1 else jnp.tanh(acc)
    o_ref[...] = h.astype(o_ref.dtype)


def ddpg_actor_forward(obs, prepared: PreparedActorParams, *, batch_tile=512,
                       vmem_limit_bytes=None):
    """obs: (B, obs_size) -> (B, act_size) in obs.dtype.

    Parameters must come from prepare_params() (padded/cast once, not per call).
    """
    n_layers = len(prepared.flat) // 2
    B, obs_size = obs.shape
    assert obs_size == prepared.obs_size, "obs feature width mismatch"
    in_dims, out_dims = prepared.in_dims, prepared.out_dims

    # Batch tile: multiple of the sublane packing of the compute dtype. Big
    # tiles amortize the ~0.35us/grid-step overhead (activations live in VMEM,
    # not vregs, so there is no register-file cap).
    sub = _sublane_multiple(prepared.compute_dtype)
    tb = min(batch_tile, _round_up(B, sub))
    tb = max(sub, _round_up(tb, sub))
    # Guarantee >= 2 batch tiles when the batch allows it so ("parallel",)
    # can shard across both TensorCores on v7x (harmless on v5e/v6e).
    if pl.cdiv(B, tb) < 2 and B > sub:
        tb = max(sub, _round_up(pl.cdiv(B, 2), sub))
    B_p = _round_up(B, tb)
    grid = (B_p // tb,)

    # Only the batch dim is padded (tiny); obs features keep their true width
    # and are cast to the compute dtype inside the kernel.
    obs_pad = jnp.pad(obs, ((0, B_p - B), (0, 0))) if B_p != B else obs

    kernel = functools.partial(_mlp_kernel, n_layers)
    out_dtype = obs.dtype
    cost = pl.CostEstimate(
        flops=2 * B_p * sum(i * o for i, o in zip(in_dims, out_dims)),
        transcendentals=B_p * out_dims[-1],
        bytes_accessed=(obs_pad.size * obs_pad.dtype.itemsize
                        + sum(p.size * p.dtype.itemsize for p in prepared.flat)
                        + B_p * out_dims[-1] * jnp.dtype(out_dtype).itemsize),
    )

    def _call(single_buffer_params: bool):
        def param_spec(shape):
            if single_buffer_params:
                # Constant index_map -> VMEM-resident block; one buffer suffices.
                return pl.BlockSpec(shape, lambda g: (0, 0),
                                    pipeline_mode=pl.Buffered(1))
            return pl.BlockSpec(shape, lambda g: (0, 0))

        in_specs = [pl.BlockSpec((tb, obs_size), lambda g: (g, 0))]
        for i in range(n_layers):
            in_specs.append(param_spec((in_dims[i], out_dims[i])))
            in_specs.append(param_spec((1, out_dims[i])))

        return pl.pallas_call(
            kernel,
            out_shape=jax.ShapeDtypeStruct((B_p, out_dims[-1]), out_dtype),
            grid=grid,
            in_specs=in_specs,
            out_specs=pl.BlockSpec((tb, out_dims[-1]), lambda g: (g, 0)),
            compiler_params=pltpu.CompilerParams(
                dimension_semantics=("parallel",),   # shard batch tiles (v7x)
                vmem_limit_bytes=vmem_limit_bytes,   # set explicitly for wide layers / v5e
            ),
            cost_estimate=cost,
        )(obs_pad, *prepared.flat)

    try:
        out = _call(True)
    except Exception:
        # Fallback for Pallas versions that reject single-buffered blocks.
        out = _call(False)

    return out[:B, :prepared.act_size]


def init_params(key, obs_size, act_size, hidden=(128,)):
    """Deterministic init. Weights stored as (in, out), bias (1, out); f32."""
    sizes = [obs_size, *hidden, act_size]
    params = []
    for in_f, out_f in zip(sizes[:-1], sizes[1:]):
        key, kw, kb = jax.random.split(key, 3)
        bound = 1.0 / jnp.sqrt(jnp.float32(in_f))   # mimics torch Linear init range
        w = jax.random.uniform(kw, (in_f, out_f), jnp.float32, -bound, bound)
        b = jax.random.uniform(kb, (1, out_f), jnp.float32, -bound, bound)
        params.append((w, b))
    return params


def reference_forward(obs, params, compute_dtype=None):
    """Pure-JAX reference mirroring the kernel's dtype handling."""
    dt = jnp.dtype(compute_dtype) if compute_dtype is not None else obs.dtype
    h = obs.astype(dt)
    n = len(params)
    for i, (w, b) in enumerate(params):
        acc = jnp.dot(h, w.astype(dt), preferred_element_type=jnp.float32) + b
        if i < n - 1:
            h = jnp.maximum(acc, 0.0).astype(dt)
        else:
            h = jnp.tanh(acc)
    return h.astype(obs.dtype)


if __name__ == "__main__":
    obs_size, act_size = 16, 8
    hidden = (128, 64)     # input layer, one hidden layer, output layer
    batch = 200            # not a multiple of the batch tile -> exercises padding

    key = jax.random.PRNGKey(0)
    key, k_obs = jax.random.split(key)
    obs = jax.random.normal(k_obs, (batch, obs_size), jnp.float32)
    params = init_params(key, obs_size, act_size, hidden)

    # f32 path: strict check vs reference.
    prep_f32 = prepare_params(params, jnp.float32)      # pad/cast ONCE
    out_f32 = jax.block_until_ready(ddpg_actor_forward(obs, prep_f32))
    ref_f32 = reference_forward(obs, params, jnp.float32)
    assert out_f32.shape == (batch, act_size)
    assert jnp.allclose(out_f32, ref_f32, atol=1e-5, rtol=1e-5), "f32 mismatch vs reference"
    assert bool(jnp.all(jnp.abs(out_f32) <= 1.0)), "tanh output out of range"

    # bf16 path: native MXU input dtype on v5e/v6e/v7x, f32 accumulation.
    prep_bf16 = prepare_params(params, jnp.bfloat16)
    out_bf16 = jax.block_until_ready(ddpg_actor_forward(obs, prep_bf16))
    ref_bf16 = reference_forward(obs, params, jnp.bfloat16)
    assert out_bf16.shape == (batch, act_size)
    assert jnp.allclose(out_bf16, ref_bf16, atol=2e-2, rtol=2e-2), "bf16 mismatch vs reference"
    assert bool(jnp.all(jnp.abs(out_bf16) <= 1.0)), "tanh output out of range"

    # TODO(synk): fp8 weight path for v7x only becomes interesting once the
    # actor is wide enough to be MXU-bound; not needed at these sizes.

    print("KERNEL_OK")
</pallas_src>

<mosaic_0001>
module attributes {stable_mosaic.version = 11 : i64} {
  func.func @_mlp_kernel(%arg0: i32, %arg1: memref<104x16xf32, #tpu.memory_space<vmem>>, %arg2: memref<16x128xf32, #tpu.memory_space<vmem>>, %arg3: memref<1x128xf32, #tpu.memory_space<vmem>>, %arg4: memref<128x128xf32, #tpu.memory_space<vmem>>, %arg5: memref<1x128xf32, #tpu.memory_space<vmem>>, %arg6: memref<128x128xf32, #tpu.memory_space<vmem>>, %arg7: memref<1x128xf32, #tpu.memory_space<vmem>>, %arg8: memref<104x128xf32, #tpu.memory_space<vmem>>) attributes {dimension_semantics = [#tpu.dimension_semantics<parallel>], iteration_bounds = array<i64: 2>, scalar_prefetch = 0 : i64, scratch_operands = 0 : i64, tpu.core_type = #tpu.core_type<tc>, window_params = [{transform_indices = @transform_0, window_bounds = array<i64: 104, 16>}, {pipeline_mode = #tpu.pipeline_mode<synchronous>, transform_indices = @transform_1, window_bounds = array<i64: 16, 128>}, {pipeline_mode = #tpu.pipeline_mode<synchronous>, transform_indices = @transform_2, window_bounds = array<i64: 1, 128>}, {pipeline_mode = #tpu.pipeline_mode<synchronous>, transform_indices = @transform_3, window_bounds = array<i64: 128, 128>}, {pipeline_mode = #tpu.pipeline_mode<synchronous>, transform_indices = @transform_4, window_bounds = array<i64: 1, 128>}, {pipeline_mode = #tpu.pipeline_mode<synchronous>, transform_indices = @transform_5, window_bounds = array<i64: 128, 128>}, {pipeline_mode = #tpu.pipeline_mode<synchronous>, transform_indices = @transform_6, window_bounds = array<i64: 1, 128>}, {transform_indices = @transform_7, window_bounds = array<i64: 104, 128>}]} {
    %c0 = arith.constant 0 : index
    %c0_0 = arith.constant 0 : index
    %0 = vector.load %arg1[%c0, %c0_0] : memref<104x16xf32, #tpu.memory_space<vmem>>, vector<104x16xf32>
    %c0_1 = arith.constant 0 : index
    %c0_2 = arith.constant 0 : index
    %1 = vector.load %arg2[%c0_1, %c0_2] : memref<16x128xf32, #tpu.memory_space<vmem>>, vector<16x128xf32>
    %c0_3 = arith.constant 0 : index
    %c0_4 = arith.constant 0 : index
    %2 = vector.load %arg3[%c0_3, %c0_4] : memref<1x128xf32, #tpu.memory_space<vmem>>, vector<1x128xf32>
    %cst = arith.constant dense<0.000000e+00> : vector<104x128xf32>
    %3 = tpu.matmul %0, %1, %cst {dimension_numbers = #tpu.dot_dimension_numbers<[1], [0], [0], [1], [0, 0, 1, 1], [], []>} : vector<104x16xf32>, vector<16x128xf32>, vector<104x128xf32> -> vector<104x128xf32>
    %4 = vector.broadcast %2 : vector<1x128xf32> to vector<104x128xf32>
    %5 = arith.addf %3, %4 : vector<104x128xf32>
    %cst_5 = arith.constant 0.000000e+00 : f32
    %6 = vector.broadcast %cst_5 : f32 to vector<104x128xf32>
    %7 = arith.maximumf %5, %6 : vector<104x128xf32>
    %c0_6 = arith.constant 0 : index
    %c0_7 = arith.constant 0 : index
    %8 = vector.load %arg4[%c0_6, %c0_7] : memref<128x128xf32, #tpu.memory_space<vmem>>, vector<128x128xf32>
    %c0_8 = arith.constant 0 : index
    %c0_9 = arith.constant 0 : index
    %9 = vector.load %arg5[%c0_8, %c0_9] : memref<1x128xf32, #tpu.memory_space<vmem>>, vector<1x128xf32>
    %cst_10 = arith.constant dense<0.000000e+00> : vector<104x128xf32>
    %10 = tpu.matmul %7, %8, %cst_10 {dimension_numbers = #tpu.dot_dimension_numbers<[1], [0], [0], [1], [0, 0, 1, 1], [], []>} : vector<104x128xf32>, vector<128x128xf32>, vector<104x128xf32> -> vector<104x128xf32>
    %11 = vector.broadcast %9 : vector<1x128xf32> to vector<104x128xf32>
    %12 = arith.addf %10, %11 : vector<104x128xf32>
    %cst_11 = arith.constant 0.000000e+00 : f32
    %13 = vector.broadcast %cst_11 : f32 to vector<104x128xf32>
    %14 = arith.maximumf %12, %13 : vector<104x128xf32>
    %c0_12 = arith.constant 0 : index
    %c0_13 = arith.constant 0 : index
    %15 = vector.load %arg6[%c0_12, %c0_13] : memref<128x128xf32, #tpu.memory_space<vmem>>, vector<128x128xf32>
    %c0_14 = arith.constant 0 : index
    %c0_15 = arith.constant 0 : index
    %16 = vector.load %arg7[%c0_14, %c0_15] : memref<1x128xf32, #tpu.memory_space<vmem>>, vector<1x128xf32>
    %cst_16 = arith.constant dense<0.000000e+00> : vector<104x128xf32>
    %17 = tpu.matmul %14, %15, %cst_16 {dimension_numbers = #tpu.dot_dimension_numbers<[1], [0], [0], [1], [0, 0, 1, 1], [], []>} : vector<104x128xf32>, vector<128x128xf32>, vector<104x128xf32> -> vector<104x128xf32>
    %18 = vector.broadcast %16 : vector<1x128xf32> to vector<104x128xf32>
    %19 = arith.addf %17, %18 : vector<104x128xf32>
    %20 = math.tanh %19 : vector<104x128xf32>
    %c0_17 = arith.constant 0 : index
    %c0_18 = arith.constant 0 : index
    %21 = vector.load %arg8[%c0_17, %c0_18] : memref<104x128xf32, #tpu.memory_space<vmem>>, vector<104x128xf32>
    tpu.vector_store %arg8[%c0_17, %c0_18], %20 {strides = array<i32>} : memref<104x128xf32, #tpu.memory_space<vmem>>, vector<104x128xf32>,
    return
  }
  func.func @transform_0(%arg0: i32) -> (i32, i32) {
    %c0_i32 = arith.constant 0 : i32
    %c0_i32_0 = arith.constant 0 : i32
    return %arg0, %c0_i32 : i32, i32
  }
  func.func @transform_1(%arg0: i32) -> (i32, i32) {
    %c0_i32 = arith.constant 0 : i32
    %c0_i32_0 = arith.constant 0 : i32
    %c0_i32_1 = arith.constant 0 : i32
    return %c0_i32, %c0_i32_0 : i32, i32
  }
  func.func @transform_2(%arg0: i32) -> (i32, i32) {
    %c0_i32 = arith.constant 0 : i32
    %c0_i32_0 = arith.constant 0 : i32
    %c0_i32_1 = arith.constant 0 : i32
    return %c0_i32, %c0_i32_0 : i32, i32
  }
  func.func @transform_3(%arg0: i32) -> (i32, i32) {
    %c0_i32 = arith.constant 0 : i32
    %c0_i32_0 = arith.constant 0 : i32
    %c0_i32_1 = arith.constant 0 : i32
    return %c0_i32, %c0_i32_0 : i32, i32
  }
  func.func @transform_4(%arg0: i32) -> (i32, i32) {
    %c0_i32 = arith.constant 0 : i32
    %c0_i32_0 = arith.constant 0 : i32
    %c0_i32_1 = arith.constant 0 : i32
    return %c0_i32, %c0_i32_0 : i32, i32
  }
  func.func @transform_5(%arg0: i32) -> (i32, i32) {
    %c0_i32 = arith.constant 0 : i32
    %c0_i32_0 = arith.constant 0 : i32
    %c0_i32_1 = arith.constant 0 : i32
    return %c0_i32, %c0_i32_0 : i32, i32
  }
  func.func @transform_6(%arg0: i32) -> (i32, i32) {
    %c0_i32 = arith.constant 0 : i32
    %c0_i32_0 = arith.constant 0 : i32
    %c0_i32_1 = arith.constant 0 : i32
    return %c0_i32, %c0_i32_0 : i32, i32
  }
  func.func @transform_7(%arg0: i32) -> (i32, i32) {
    %c0_i32 = arith.constant 0 : i32
    %c0_i32_0 = arith.constant 0 : i32
    return %arg0, %c0_i32 : i32, i32
  }
}

module attributes {stable_mosaic.version = 11 : i64} {
  func.func @_mlp_kernel(%arg0: i32, %arg1: memref<104x16xf32, #tpu.memory_space<vmem>>, %arg2: memref<16x128xf32, #tpu.memory_space<vmem>>, %arg3: memref<1x128xf32, #tpu.memory_space<vmem>>, %arg4: memref<128x128xf32, #tpu.memory_space<vmem>>, %arg5: memref<1x128xf32, #tpu.memory_space<vmem>>, %arg6: memref<128x128xf32, #tpu.memory_space<vmem>>, %arg7: memref<1x128xf32, #tpu.memory_space<vmem>>, %arg8: memref<104x128xf32, #tpu.memory_space<vmem>>) attributes {dimension_semantics = [#tpu.dimension_semantics<parallel>], iteration_bounds = array<i64: 2>, scalar_prefetch = 0 : i64, scratch_operands = 0 : i64, tpu.core_type = #tpu.core_type<tc>, window_params = [{transform_indices = @transform_0, window_bounds = array<i64: 104, 16>}, {pipeline_mode = #tpu.pipeline_mode<synchronous>, transform_indices = @transform_1, window_bounds = array<i64: 16, 128>}, {pipeline_mode = #tpu.pipeline_mode<synchronous>, transform_indices = @transform_2, window_bounds = array<i64: 1, 128>}, {pipeline_mode = #tpu.pipeline_mode<synchronous>, transform_indices = @transform_3, window_bounds = array<i64: 128, 128>}, {pipeline_mode = #tpu.pipeline_mode<synchronous>, transform_indices = @transform_4, window_bounds = array<i64: 1, 128>}, {pipeline_mode = #tpu.pipeline_mode<synchronous>, transform_indices = @transform_5, window_bounds = array<i64: 128, 128>}, {pipeline_mode = #tpu.pipeline_mode<synchronous>, transform_indices = @transform_6, window_bounds = array<i64: 1, 128>}, {transform_indices = @transform_7, window_bounds = array<i64: 104, 128>}]} {
    %c0 = arith.constant 0 : index
    %c0_0 = arith.constant 0 : index
    %0 = vector.load %arg1[%c0, %c0_0] : memref<104x16xf32, #tpu.memory_space<vmem>>, vector<104x16xf32>
    %c0_1 = arith.constant 0 : index
    %c0_2 = arith.constant 0 : index
    %1 = vector.load %arg2[%c0_1, %c0_2] : memref<16x128xf32, #tpu.memory_space<vmem>>, vector<16x128xf32>
    %c0_3 = arith.constant 0 : index
    %c0_4 = arith.constant 0 : index
    %2 = vector.load %arg3[%c0_3, %c0_4] : memref<1x128xf32, #tpu.memory_space<vmem>>, vector<1x128xf32>
    %cst = arith.constant dense<0.000000e+00> : vector<104x128xf32>
    %3 = tpu.matmul %0, %1, %cst {dimension_numbers = #tpu.dot_dimension_numbers<[1], [0], [0], [1], [0, 0, 1, 1], [], []>} : vector<104x16xf32>, vector<16x128xf32>, vector<104x128xf32> -> vector<104x128xf32>
    %4 = vector.broadcast %2 : vector<1x128xf32> to vector<104x128xf32>
    %5 = arith.addf %3, %4 : vector<104x128xf32>
    %cst_5 = arith.constant 0.000000e+00 : f32
    %6 = vector.broadcast %cst_5 : f32 to vector<104x128xf32>
    %7 = arith.maximumf %5, %6 : vector<104x128xf32>
    %c0_6 = arith.constant 0 : index
    %c0_7 = arith.constant 0 : index
    %8 = vector.load %arg4[%c0_6, %c0_7] : memref<128x128xf32, #tpu.memory_space<vmem>>, vector<128x128xf32>
    %c0_8 = arith.constant 0 : index
    %c0_9 = arith.constant 0 : index
    %9 = vector.load %arg5[%c0_8, %c0_9] : memref<1x128xf32, #tpu.memory_space<vmem>>, vector<1x128xf32>
    %cst_10 = arith.constant dense<0.000000e+00> : vector<104x128xf32>
    %10 = tpu.matmul %7, %8, %cst_10 {dimension_numbers = #tpu.dot_dimension_numbers<[1], [0], [0], [1], [0, 0, 1, 1], [], []>} : vector<104x128xf32>, vector<128x128xf32>, vector<104x128xf32> -> vector<104x128xf32>
    %11 = vector.broadcast %9 : vector<1x128xf32> to vector<104x128xf32>
    %12 = arith.addf %10, %11 : vector<104x128xf32>
    %cst_11 = arith.constant 0.000000e+00 : f32
    %13 = vector.broadcast %cst_11 : f32 to vector<104x128xf32>
    %14 = arith.maximumf %12, %13 : vector<104x128xf32>
    %c0_12 = arith.constant 0 : index
    %c0_13 = arith.constant 0 : index
    %15 = vector.load %arg6[%c0_12, %c0_13] : memref<128x128xf32, #tpu.memory_space<vmem>>, vector<128x128xf32>
    %c0_14 = arith.constant 0 : index
    %c0_15 = arith.constant 0 : index
    %16 = vector.load %arg7[%c0_14, %c0_15] : memref<1x128xf32, #tpu.memory_space<vmem>>, vector<1x128xf32>
    %cst_16 = arith.constant dense<0.000000e+00> : vector<104x128xf32>
    %17 = tpu.matmul %14, %15, %cst_16 {dimension_numbers = #tpu.dot_dimension_numbers<[1], [0], [0], [1], [0, 0, 1, 1], [], []>} : vector<104x128xf32>, vector<128x128xf32>, vector<104x128xf32> -> vector<104x128xf32>
    %18 = vector.broadcast %16 : vector<1x128xf32> to vector<104x128xf32>
    %19 = arith.addf %17, %18 : vector<104x128xf32>
    %20 = math.tanh %19 : vector<104x128xf32>
    %c0_17 = arith.constant 0 : index
    %c0_18 = arith.constant 0 : index
    %21 = vector.load %arg8[%c0_17, %c0_18] : memref<104x128xf32, #tpu.memory_space<vmem>>, vector<104x128xf32>
    tpu.vector_store %arg8[%c0_17, %c0_18], %20 {strides = array<i32>} : memref<104x128xf32, #tpu.memory_space<vmem>>, vector<104x128xf32>,
    return
  }
  func.func @transform_0(%arg0: i32) -> (i32, i32) {
    %c0_i32 = arith.constant 0 : i32
    %c0_i32_0 = arith.constant 0 : i32
    return %arg0, %c0_i32 : i32, i32
  }
  func.func @transform_1(%arg0: i32) -> (i32, i32) {
    %c0_i32 = arith.constant 0 : i32
    %c0_i32_0 = arith.constant 0 : i32
    %c0_i32_1 = arith.constant 0 : i32
    return %c0_i32, %c0_i32_0 : i32, i32
  }
  func.func @transform_2(%arg0: i32) -> (i32, i32) {
    %c0_i32 = arith.constant 0 : i32
    %c0_i32_0 = arith.constant 0 : i32
    %c0_i32_1 = arith.constant 0 : i32
    return %c0_i32, %c0_i32_0 : i32, i32
  }
  func.func @transform_3(%arg0: i32) -> (i32, i32) {
    %c0_i32 = arith.constant 0 : i32
    %c0_i32_0 = arith.constant 0 : i32
    %c0_i32_1 = arith.constant 0 : i32
    return %c0_i32, %c0_i32_0 : i32, i32
  }
  func.func @transform_4(%arg0: i32) -> (i32, i32) {
    %c0_i32 = arith.constant 0 : i32
    %c0_i32_0 = arith.constant 0 : i32
    %c0_i32_1 = arith.constant 0 : i32
    return %c0_i32, %c0_i32_0 : i32, i32
  }
  func.func @transform_5(%arg0: i32) -> (i32, i32) {
    %c0_i32 = arith.constant 0 : i32
    %c0_i32_0 = arith.constant 0 : i32
    %c0_i32_1 = arith.constant 0 : i32
    return %c0_i32, %c0_i32_0 : i32, i32
  }
  func.func @transform_6(%arg0: i32) -> (i32, i32) {
    %c0_i32 = arith.constant 0 : i32
    %c0_i32_0 = arith.constant 0 : i32
    %c0_i32_1 = arith.constant 0 : i32
    return %c0_i32, %c0_i32_0 : i32, i32
  }
  func.func @transform_7(%arg0: i32) -> (i32, i32) {
    %c0_i32 = arith.constant 0 : i32
    %c0_i32_0 = arith.constant 0 : i32
    return %arg0, %c0_i32 : i32, i32
  }
}

</mosaic_0001>

<llo_original>
// kernel: tpu_custom_call.1
$region0: #{tpu_custom_call.1}
  #allocation0 [shape = 'u32[]', space=smem, size = 0x4, offset = 0x4, fixed_abs, tag = 'smem constant byte address 0x4 - core index']
  #allocation1 [shape = 'u32[144,128]{1,0:T(1,128)}', space=vmem, size = 0x12000, scoped, tag = 'internal scratch']
  %s0 = inlined_call_operand.vmem [shape: f32[208,16], index: 0, kind: input, shape index: {}]
  %s1 = inlined_call_operand.vmem [shape: f32[16,128], index: 1, kind: input, shape index: {}]
  %s2 = inlined_call_operand.vmem [shape: f32[1,128], index: 2, kind: input, shape index: {}]
  %s3 = inlined_call_operand.vmem [shape: f32[128,128], index: 3, kind: input, shape index: {}]
  %s4 = inlined_call_operand.vmem [shape: f32[1,128], index: 4, kind: input, shape index: {}]
  %s5 = inlined_call_operand.hbm [shape: f32[128,128], index: 5, kind: input, shape index: {}]
  %s6 = inlined_call_operand.vmem [shape: f32[1,128], index: 6, kind: input, shape index: {}]
  %s7 = inlined_call_operand.hbm [shape: f32[208,128], index: 7, kind: output, shape index: {}]
  %s8 = sld [smem:[#allocation0]]
  $region65: #{tpu_custom_call.1} parent=0
    _
  %s10 = ssub.s32 1, %s8
  %s11 = scalar_select 0, %s10, %s8
  $region1: #{tpu_custom_call.1} parent=0
    #allocation2 [shape = 'u8[65536]{0}', space=vmem, size = 0x10000, scoped, tag = 'input window, operand 5, single buffered']
    #allocation3 [shape = 's32[2]{0}', space=sflag, size = 0x8, scoped, tag = 'scoped memory for tpu_custom_call.1']
    #allocation4 [shape = 's32[2]{0}', space=sflag, size = 0x8, scoped, tag = 'scoped memory for tpu_custom_call.1']
    #allocation5 [shape = 'u8[106496]{0}', space=vmem, size = 0x1a000, scoped, tag = 'output window, operand 0']
    %12 = vsyncpa [#allocation3], 0
    %13 = vsyncpa [#allocation4], 0
    %s14 = scalar_lea.sflag [#allocation4], 1
    %15 = vsyncpa %s14, 0
    loop: start=0, step=1, limit=4
    $region2: #{tpu_custom_call.1} parent=1 // loop_pre_header
      _
    $region3: #{tpu_custom_call.1} parent=1 // loop_header
      %s17 = sphi 0, %s21
      %p18 = scmp.ge.s32.totalorder %s17, 4
      %s27 = sphi 0, %s29
      %s30 = sphi 0, %s27
      %s31 = sphi 0, %s30
      %s47 = sphi 0, %s31
      %s51 = sphi 0, %s51
      %s53 = sphi 0, %s51
      %s54 = sphi 0, %s53
      %s68 = sphi 0, %s54
      %s72 = sphi 0, %s72
      %s74 = sphi 0, %s72
      %s75 = sphi 0, %s74
      %s89 = sphi 0, %s75
      %s93 = sphi 0, %s93
      %s95 = sphi 0, %s93
      %s96 = sphi 0, %s95
      %s110 = sphi 0, %s96
      %s114 = sphi 0, %s114
      %s116 = sphi 0, %s114
      %s117 = sphi 0, %s116
      %s131 = sphi 0, %s117
      %s135 = sphi 0, %s135
      %s137 = sphi 0, %s135
      %s138 = sphi 0, %s137
      %s152 = sphi 0, %s138
      %s156 = sphi 0, %s156
      %s158 = sphi 0, %s156
      %s159 = sphi 0, %s158
      %s173 = sphi 0, %s159
      %s179 = sphi 0, %s181
      %s182 = sphi 0, %s179
      %s183 = sphi 0, %s182
      %s199 = sphi 0, %s183
    $region4: #{tpu_custom_call.1} parent=1 // loop_header_branch
      %20 = sbr.rel (%p18) target = $region8
    $region5: #{tpu_custom_call.1} parent=1 // loop_body
      %s22 = ssub.s32 %s17, 1
      %s23 = ssub.s32 %s17, 2
      %s24 = sadd.s32 %s17, 1
      %s25 = ssub.s32 %s17, %s24
      %p26 = scmp.eq.s32.totalorder %s25, 0
      %s28 = sadd.s32 %s27, 1
      %s29 = scalar_select %p26, %s27, %s28
      %p32 = pneg %p26
      %p33 = scmp.eq.s32.totalorder %s17, 1
      %p34 = por %p32, %p33
      %p35 = scmp.ne.s32.totalorder %s27, %s30
      %p36 = scmp.eq.s32.totalorder %s17, 0
      %p37 = por %p35, %p36
      %p38 = scmp.ne.s32.totalorder %s27, %s30
      %p39 = scmp.eq.s32.totalorder %s22, 1
      %p40 = por %p38, %p39
      %p41 = scmp.ne.s32.totalorder %s30, %s31
      %p42 = scmp.eq.s32.totalorder %s22, 0
      %p43 = por %p41, %p42
      %p44 = scmp.ne.s32.totalorder %s30, %s31
      %p45 = scmp.eq.s32.totalorder %s23, 1
      %p46 = por %p44, %p45
      %p48 = scmp.ne.s32.totalorder %s31, %s47
      %p49 = scmp.eq.s32.totalorder %s23, 0
      %p50 = por %p48, %p49
      %s52 = sadd.s32 %s51, 1
      %p55 = scmp.eq.s32.totalorder %s17, 1
      %p56 = scmp.ne.s32.totalorder %s51, %s53
      %p57 = scmp.eq.s32.totalorder %s17, 0
      %p58 = por %p56, %p57
      %p59 = scmp.ne.s32.totalorder %s51, %s53
      %p60 = scmp.eq.s32.totalorder %s22, 1
      %p61 = por %p59, %p60
      %p62 = scmp.ne.s32.totalorder %s53, %s54
      %p63 = scmp.eq.s32.totalorder %s22, 0
      %p64 = por %p62, %p63
      %p65 = scmp.ne.s32.totalorder %s53, %s54
      %p66 = scmp.eq.s32.totalorder %s23, 1
      %p67 = por %p65, %p66
      %p69 = scmp.ne.s32.totalorder %s54, %s68
      %p70 = scmp.eq.s32.totalorder %s23, 0
      %p71 = por %p69, %p70
      %s73 = sadd.s32 %s72, 1
      %p76 = scmp.eq.s32.totalorder %s17, 1
      %p77 = scmp.ne.s32.totalorder %s72, %s74
      %p78 = scmp.eq.s32.totalorder %s17, 0
      %p79 = por %p77, %p78
      %p80 = scmp.ne.s32.totalorder %s72, %s74
      %p81 = scmp.eq.s32.totalorder %s22, 1
      %p82 = por %p80, %p81
      %p83 = scmp.ne.s32.totalorder %s74, %s75
      %p84 = scmp.eq.s32.totalorder %s22, 0
      %p85 = por %p83, %p84
      %p86 = scmp.ne.s32.totalorder %s74, %s75
      %p87 = scmp.eq.s32.totalorder %s23, 1
      %p88 = por %p86, %p87
      %p90 = scmp.ne.s32.totalorder %s75, %s89
      %p91 = scmp.eq.s32.totalorder %s23, 0
      %p92 = por %p90, %p91
      %s94 = sadd.s32 %s93, 1
      %p97 = scmp.eq.s32.totalorder %s17, 1
      %p98 = scmp.ne.s32.totalorder %s93, %s95
      %p99 = scmp.eq.s32.totalorder %s17, 0
      %p100 = por %p98, %p99
      %p101 = scmp.ne.s32.totalorder %s93, %s95
      %p102 = scmp.eq.s32.totalorder %s22, 1
      %p103 = por %p101, %p102
      %p104 = scmp.ne.s32.totalorder %s95, %s96
      %p105 = scmp.eq.s32.totalorder %s22, 0
      %p106 = por %p104, %p105
      %p107 = scmp.ne.s32.totalorder %s95, %s96
      %p108 = scmp.eq.s32.totalorder %s23, 1
      %p109 = por %p107, %p108
      %p111 = scmp.ne.s32.totalorder %s96, %s110
      %p112 = scmp.eq.s32.totalorder %s23, 0
      %p113 = por %p111, %p112
      %s115 = sadd.s32 %s114, 1
      %p118 = scmp.eq.s32.totalorder %s17, 1
      %p119 = scmp.ne.s32.totalorder %s114, %s116
      %p120 = scmp.eq.s32.totalorder %s17, 0
      %p121 = por %p119, %p120
      %p122 = scmp.ne.s32.totalorder %s114, %s116
      %p123 = scmp.eq.s32.totalorder %s22, 1
      %p124 = por %p122, %p123
      %p125 = scmp.ne.s32.totalorder %s116, %s117
      %p126 = scmp.eq.s32.totalorder %s22, 0
      %p127 = por %p125, %p126
      %p128 = scmp.ne.s32.totalorder %s116, %s117
      %p129 = scmp.eq.s32.totalorder %s23, 1
      %p130 = por %p128, %p129
      %p132 = scmp.ne.s32.totalorder %s117, %s131
      %p133 = scmp.eq.s32.totalorder %s23, 0
      %p134 = por %p132, %p133
      %s136 = sadd.s32 %s135, 1
      %p139 = scmp.eq.s32.totalorder %s17, 1
      %p140 = scmp.ne.s32.totalorder %s135, %s137
      %p141 = scmp.eq.s32.totalorder %s17, 0
      %p142 = por %p140, %p141
      %p143 = scmp.ne.s32.totalorder %s135, %s137
      %p144 = scmp.eq.s32.totalorder %s22, 1
      %p145 = por %p143, %p144
      %p146 = scmp.ne.s32.totalorder %s137, %s138
      %p147 = scmp.eq.s32.totalorder %s22, 0
      %p148 = por %p146, %p147
      %p149 = scmp.ne.s32.totalorder %s137, %s138
      %p150 = scmp.eq.s32.totalorder %s23, 1
      %p151 = por %p149, %p150
      %p153 = scmp.ne.s32.totalorder %s138, %s152
      %p154 = scmp.eq.s32.totalorder %s23, 0
      %p155 = por %p153, %p154
      %s157 = sadd.s32 %s156, 1
      %p160 = scmp.eq.s32.totalorder %s17, 1
      %p161 = scmp.ne.s32.totalorder %s156, %s158
      %p162 = scmp.eq.s32.totalorder %s17, 0
      %p163 = por %p161, %p162
      %p164 = scmp.ne.s32.totalorder %s156, %s158
      %p165 = scmp.eq.s32.totalorder %s22, 1
      %p166 = por %p164, %p165
      %p167 = scmp.ne.s32.totalorder %s158, %s159
      %p168 = scmp.eq.s32.totalorder %s22, 0
      %p169 = por %p167, %p168
      %p170 = scmp.ne.s32.totalorder %s158, %s159
      %p171 = scmp.eq.s32.totalorder %s23, 1
      %p172 = por %p170, %p171
      %p174 = scmp.ne.s32.totalorder %s159, %s173
      %p175 = scmp.eq.s32.totalorder %s23, 0
      %p176 = por %p174, %p175
      %s177 = ssub.s32 %s17, %s24
      %p178 = scmp.eq.s32.totalorder %s177, 0
      %s180 = sadd.s32 %s179, 1
      %s181 = scalar_select %p178, %s179, %s180
      %p184 = pneg %p178
      %p185 = scmp.eq.s32.totalorder %s17, 1
      %p186 = por %p184, %p185
      %p187 = scmp.ne.s32.totalorder %s179, %s182
      %p188 = scmp.eq.s32.totalorder %s17, 0
      %p189 = por %p187, %p188
      %p190 = scmp.ne.s32.totalorder %s179, %s182
      %p191 = scmp.eq.s32.totalorder %s22, 1
      %p192 = por %p190, %p191
      %p193 = scmp.ne.s32.totalorder %s182, %s183
      %p194 = scmp.eq.s32.totalorder %s22, 0
      %p195 = por %p193, %p194
      %p196 = scmp.ne.s32.totalorder %s182, %s183
      %p197 = scmp.eq.s32.totalorder %s23, 1
      %p198 = por %p196, %p197
      %p200 = scmp.ne.s32.totalorder %s183, %s199
      %p201 = scmp.eq.s32.totalorder %s23, 0
      %p202 = por %p200, %p201
      %p203 = scmp.le.s32.totalorder 1, %s17
      %p204 = scmp.lt.s32.totalorder %s17, 3
      %p205 = pnand %p203, %p204
      %p206 = pneg %p205
      // Predicated region
      $region9: #{tpu_custom_call.1} parent=5 // pred_check
        _
      $region10: #{tpu_custom_call.1} parent=5 // pred_check_branch
        %208 = sbr.rel (%p205) target = $region12
      $region11: #{tpu_custom_call.1} parent=5 // pred_region
        %s209 = ssub.s32 %s17, 1
        // Predicated region
        $region13: #{tpu_custom_call.1} parent=11 // pred_check
          %p210 = pneg %p64
        $region14: #{tpu_custom_call.1} parent=11 // pred_check_branch
          %212 = sbr.rel (%p210) target = $region16
        $region15: #{tpu_custom_call.1} parent=11 // pred_region
          _
        $region16: #{tpu_custom_call.1} parent=11 // pred_fallthru
          _
        // Predicated region
        $region17: #{tpu_custom_call.1} parent=11 // pred_check
          %p213 = pneg %p85
        $region18: #{tpu_custom_call.1} parent=11 // pred_check_branch
          %215 = sbr.rel (%p213) target = $region20
        $region19: #{tpu_custom_call.1} parent=11 // pred_region
          _
        $region20: #{tpu_custom_call.1} parent=11 // pred_fallthru
          _
        // Predicated region
        $region21: #{tpu_custom_call.1} parent=11 // pred_check
          %p216 = pneg %p106
        $region22: #{tpu_custom_call.1} parent=11 // pred_check_branch
          %218 = sbr.rel (%p216) target = $region24
        $region23: #{tpu_custom_call.1} parent=11 // pred_region
          _
        $region24: #{tpu_custom_call.1} parent=11 // pred_fallthru
          _
        // Predicated region
        $region25: #{tpu_custom_call.1} parent=11 // pred_check
          %p219 = pneg %p127
        $region26: #{tpu_custom_call.1} parent=11 // pred_check_branch
          %221 = sbr.rel (%p219) target = $region28
        $region27: #{tpu_custom_call.1} parent=11 // pred_region
          _
        $region28: #{tpu_custom_call.1} parent=11 // pred_fallthru
          _
        // Predicated region
        $region29: #{tpu_custom_call.1} parent=11 // pred_check
          %p222 = pneg %p148
        $region30: #{tpu_custom_call.1} parent=11 // pred_check_branch
          %224 = sbr.rel (%p222) target = $region32
        $region31: #{tpu_custom_call.1} parent=11 // pred_region
          %s226 = ssub.s32 2048, 2048
          %227 = vsyncadd [#allocation3], %s226
          %s228 = sshll.u32 [#allocation2], 4
          %s229 = int_to_ptr.vmem [resolvable:$true] %s228
          %234 = dma.hbm_to_vmem [thread:$0]  %s5, 2048, %s229, [#allocation3], 128, 128, 8
        $region32: #{tpu_custom_call.1} parent=11 // pred_fallthru
          _
        // Predicated region
        $region33: #{tpu_custom_call.1} parent=11 // pred_check
          %p235 = pneg %p169
        $region34: #{tpu_custom_call.1} parent=11 // pred_check_branch
          %237 = sbr.rel (%p235) target = $region36
        $region35: #{tpu_custom_call.1} parent=11 // pred_region
          _
        $region36: #{tpu_custom_call.1} parent=11 // pred_fallthru
          _
      $region12: #{tpu_custom_call.1} parent=5 // pred_fallthru
        _
      %p238 = scmp.lt.s32.totalorder %s17, 2
      // Predicated region
      $region37: #{tpu_custom_call.1} parent=5 // pred_check
        %p239 = pneg %p238
      $region38: #{tpu_custom_call.1} parent=5 // pred_check_branch
        %241 = sbr.rel (%p239) target = $region40
      $region39: #{tpu_custom_call.1} parent=5 // pred_region
        // Predicated region
        $region41: #{tpu_custom_call.1} parent=39 // pred_check
          %p242 = pneg %p37
        $region42: #{tpu_custom_call.1} parent=39 // pred_check_branch
          %244 = sbr.rel (%p242) target = $region44
        $region43: #{tpu_custom_call.1} parent=39 // pred_region
          %s245 = smul.u32 13, %s17
          %p246 = scmp.lt.s32.totalorder %s245, 25
          %s247 = scalar_select %p246, %s245, 25
          %s248 = smul.addr %s247, 8
          %s249 = scalar_lea.vmem %s0, %s248
          %s250 = smul.u32 13, %s17
        $region44: #{tpu_custom_call.1} parent=39 // pred_fallthru
          _
      $region40: #{tpu_custom_call.1} parent=5 // pred_fallthru
        _
      %p251 = scmp.le.s32.totalorder 1, %s17
      %p252 = scmp.lt.s32.totalorder %s17, 3
      %p253 = pnand %p251, %p252
      %p254 = pneg %p253
      // Predicated region
      $region45: #{tpu_custom_call.1} parent=5 // pred_check
        _
      $region46: #{tpu_custom_call.1} parent=5 // pred_check_branch
        %256 = sbr.rel (%p253) target = $region48
      $region47: #{tpu_custom_call.1} parent=5 // pred_region
        %s257 = ssub.s32 %s17, 1
        // Predicated region
        $region49: #{tpu_custom_call.1} parent=47 // pred_check
          %p258 = pneg %p148
        $region50: #{tpu_custom_call.1} parent=47 // pred_check_branch
          %260 = sbr.rel (%p258) target = $region52
        $region51: #{tpu_custom_call.1} parent=47 // pred_region
          %261 = dma.done [#allocation3], 2048
        $region52: #{tpu_custom_call.1} parent=47 // pred_fallthru
          _
        %s262 = smul.u32 13, %s22
        %p263 = scmp.lt.s32.totalorder %s262, 25
        %s264 = scalar_select %p263, %s262, 25
        %s265 = smul.addr %s264, 8
        %s266 = scalar_lea.vmem %s0, %s265
        %p267 = pneg %p43
        %p268 = pneg %p40
        %p269 = pneg %p64
        %p270 = pneg %p61
        %p271 = pneg %p85
        %p272 = pneg %p82
        %p273 = pneg %p106
        %p274 = pneg %p103
        %p275 = pneg %p127
        %p276 = pneg %p124
        %p277 = pneg %p148
        %p278 = pneg %p145
        %p279 = pneg %p169
        %p280 = pneg %p166
        %p281 = pneg %p195
        %p282 = pneg %p192
        %s283 = sand.u32 %s182, 1
        %s284 = scalar_lea.sflag [#allocation4], %s283
        %s285 = sand.u32 %s182, 1
        %s286 = smul.addr %s285, 104
        %s287 = scalar_lea.vmem [#allocation5], %s286
        %s288 = smul.u32 13, %s22
        %p289 = scmp.lt.s32.totalorder %s288, 25
        %s290 = scalar_select %p289, %s288, 25
        %s291 = smul.addr %s290, 8
        %s292 = scalar_lea.vmem %s0, %s291
        %s293 = smul.u32 13, %s22
        %s294 = smul.u32 13, %s22
        %v295 = vld [vmem:[%s292] sm:$0xff]
        %v296 = vld [vmem:[%s292 + $0x8] sm:$0xff]
        %v297 = vld [vmem:[%s292 + $0x10] sm:$0xff]
        %v298 = vld [vmem:[%s292 + $0x18] sm:$0xff]
        %v299 = vld [vmem:[%s292 + $0x20] sm:$0xff]
        %v300 = vld [vmem:[%s292 + $0x28] sm:$0xff]
        %v301 = vld [vmem:[%s292 + $0x30] sm:$0xff]
        %v302 = vld [vmem:[%s292 + $0x38] sm:$0xff]
        %v303 = vld [vmem:[%s292 + $0x40] sm:$0xff]
        %v304 = vld [vmem:[%s292 + $0x48] sm:$0xff]
        %v305 = vld [vmem:[%s292 + $0x50] sm:$0xff]
        %v306 = vld [vmem:[%s292 + $0x58] sm:$0xff]
        %v307 = vld [vmem:[%s292 + $0x60] sm:$0xff]
        %v308 = vld [vmem:[%s1] sm:$0xff]
        %v309 = vld [vmem:[%s1 + $0x8] sm:$0xff]
        %v310 = vld [vmem:[%s2] sm:$0x1]
        %v312 = vlaneseq
        %v313 = vshrl.u32 %v312, 7
        %v314 = vsub.s32 0, %v313
        %v315 = vrot.slane %v310, %v314
        %vm317 = vcmask 130048
        %v319 = vsel %vm317, %v295, 0
        %v322 = vsel %vm317, %v296, 0
        %v325 = vsel %vm317, %v297, 0
        %v328 = vsel %vm317, %v298, 0
        %v331 = vsel %vm317, %v299, 0
        %v334 = vsel %vm317, %v300, 0
        %v337 = vsel %vm317, %v301, 0
        %v340 = vsel %vm317, %v302, 0
        %v343 = vsel %vm317, %v303, 0
        %v346 = vsel %vm317, %v304, 0
        %v349 = vsel %vm317, %v305, 0
        %v352 = vsel %vm317, %v306, 0
        %v355 = vsel %vm317, %v307, 0
        %357 = vmatprep.subr.mxu0 0.0
        %358 = vmatpush1.msra.mxu0 0.0
        %359 = vmatprep.subr.mxu0 0.0
        %360 = vmatpush1.msra.mxu0 0.0
        %361 = vmatprep.subr.mxu0 0.0
        %362 = vmatpush1.msra.mxu0 0.0
        %363 = vmatprep.subr.mxu0 0.0
        %364 = vmatpush1.msra.mxu0 0.0
        %365 = vmatprep.subr.mxu0 0.0
        %366 = vmatpush1.msra.mxu0 0.0
        %367 = vmatprep.subr.mxu0 0.0
        %368 = vmatpush1.msra.mxu0 0.0
        %369 = vmatprep.subr.mxu0 0.0
        %370 = vmatpush1.msra.mxu0 0.0
        %371 = vmatprep.subr.mxu0 0.0
        %372 = vmatpush1.msra.mxu0 0.0
        %373 = vmatprep.subr.mxu0 0.0
        %374 = vmatpush1.msra.mxu0 0.0
        %375 = vmatprep.subr.mxu0 0.0
        %376 = vmatpush1.msra.mxu0 0.0
        %377 = vmatprep.subr.mxu0 0.0
        %378 = vmatpush1.msra.mxu0 0.0
        %379 = vmatprep.subr.mxu0 0.0
        %380 = vmatpush1.msra.mxu0 0.0
        %381 = vmatprep.subr.mxu0 0.0
        %382 = vmatpush1.msra.mxu0 0.0
        %383 = vmatprep.subr.mxu0 0.0
        %384 = vmatpush1.msra.mxu0 0.0
        %385 = vmatprep.subr.mxu0 0.0
        %386 = vmatpush1.msra.mxu0 %v309
        %387 = vmatprep.subr.mxu0 0.0
        %388 = vmatpush1.msra.mxu0 %v308
        %389 = vmatprep.subr.mxu0 0.0
        %390 = vmatpush2.msra.mxu0 0.0
        %391 = vmatprep.subr.mxu0 0.0
        %392 = vmatpush2.msra.mxu0 0.0
        %393 = vmatprep.subr.mxu0 0.0
        %394 = vmatpush2.msra.mxu0 0.0
        %395 = vmatprep.subr.mxu0 0.0
        %396 = vmatpush2.msra.mxu0 0.0
        %397 = vmatprep.subr.mxu0 0.0
        %398 = vmatpush2.msra.mxu0 0.0
        %399 = vmatprep.subr.mxu0 0.0
        %400 = vmatpush2.msra.mxu0 0.0
        %401 = vmatprep.subr.mxu0 0.0
        %402 = vmatpush2.msra.mxu0 0.0
        %403 = vmatprep.subr.mxu0 0.0
        %404 = vmatpush2.msra.mxu0 0.0
        %405 = vmatprep.subr.mxu0 0.0
        %406 = vmatpush2.msra.mxu0 0.0
        %407 = vmatprep.subr.mxu0 0.0
        %408 = vmatpush2.msra.mxu0 0.0
        %409 = vmatprep.subr.mxu0 0.0
        %410 = vmatpush2.msra.mxu0 0.0
        %411 = vmatprep.subr.mxu0 0.0
        %412 = vmatpush2.msra.mxu0 0.0
        %413 = vmatprep.subr.mxu0 0.0
        %414 = vmatpush2.msra.mxu0 0.0
        %415 = vmatprep.subr.mxu0 0.0
        %416 = vmatpush2.msra.mxu0 0.0
        %417 = vmatprep.subr.mxu0 0.0
        %418 = vmatpush2.msra.mxu0 0.0
        %419 = vmatprep.subr.mxu0 0.0
        %420 = vmatpush2.msra.mxu0 0.0
        %421 = vmatprep.mubr.f32.mxu0 0.0
        %422 = vmatmul.mubr.f32.gmra.mxu0 %v319
        %v423 = vpop.f32.mrf.mxu0
        %v424 = vadd.f32 %v315, %v423
        %v425 = vpop.f32.mrf.mxu0
        %426 = vmatprep.mubr.f32.mxu0 0.0
        %427 = vmatmul.mubr.f32.gmra.mxu0 %v322
        %v428 = vpop.f32.mrf.mxu0
        %v429 = vadd.f32 %v315, %v428
        %v430 = vpop.f32.mrf.mxu0
        %431 = vmatprep.mubr.f32.mxu0 0.0
        %432 = vmatmul.mubr.f32.gmra.mxu0 %v325
        %v433 = vpop.f32.mrf.mxu0
        %v434 = vadd.f32 %v315, %v433
        %v435 = vpop.f32.mrf.mxu0
        %436 = vmatprep.mubr.f32.mxu0 0.0
        %437 = vmatmul.mubr.f32.gmra.mxu0 %v328
        %v438 = vpop.f32.mrf.mxu0
        %v439 = vadd.f32 %v315, %v438
        %v440 = vpop.f32.mrf.mxu0
        %441 = vmatprep.mubr.f32.mxu0 0.0
        %442 = vmatmul.mubr.f32.gmra.mxu0 %v331
        %v443 = vpop.f32.mrf.mxu0
        %v444 = vadd.f32 %v315, %v443
        %v445 = vpop.f32.mrf.mxu0
        %446 = vmatprep.mubr.f32.mxu0 0.0
        %447 = vmatmul.mubr.f32.gmra.mxu0 %v334
        %v448 = vpop.f32.mrf.mxu0
        %v449 = vadd.f32 %v315, %v448
        %v450 = vpop.f32.mrf.mxu0
        %451 = vmatprep.mubr.f32.mxu0 0.0
        %452 = vmatmul.mubr.f32.gmra.mxu0 %v337
        %v453 = vpop.f32.mrf.mxu0
        %v454 = vadd.f32 %v315, %v453
        %v455 = vpop.f32.mrf.mxu0
        %456 = vmatprep.mubr.f32.mxu0 0.0
        %457 = vmatmul.mubr.f32.gmra.mxu0 %v340
        %v458 = vpop.f32.mrf.mxu0
        %v459 = vadd.f32 %v315, %v458
        %v460 = vpop.f32.mrf.mxu0
        %461 = vmatprep.mubr.f32.mxu0 0.0
        %462 = vmatmul.mubr.f32.gmra.mxu0 %v343
        %v463 = vpop.f32.mrf.mxu0
        %v464 = vadd.f32 %v315, %v463
        %v465 = vpop.f32.mrf.mxu0
        %466 = vmatprep.mubr.f32.mxu0 0.0
        %467 = vmatmul.mubr.f32.gmra.mxu0 %v346
        %v468 = vpop.f32.mrf.mxu0
        %v469 = vadd.f32 %v315, %v468
        %v470 = vpop.f32.mrf.mxu0
        %471 = vmatprep.mubr.f32.mxu0 0.0
        %472 = vmatmul.mubr.f32.gmra.mxu0 %v349
        %v473 = vpop.f32.mrf.mxu0
        %v474 = vadd.f32 %v315, %v473
        %v475 = vpop.f32.mrf.mxu0
        %476 = vmatprep.mubr.f32.mxu0 0.0
        %477 = vmatmul.mubr.f32.gmra.mxu0 %v352
        %v478 = vpop.f32.mrf.mxu0
        %v479 = vadd.f32 %v315, %v478
        %v480 = vpop.f32.mrf.mxu0
        %481 = vmatprep.mubr.f32.mxu0 0.0
        %482 = vmatmul.mubr.f32.gmra.mxu0 %v355
        %v483 = vpop.f32.mrf.mxu0
        %v484 = vadd.f32 %v315, %v483
        %v485 = vpop.f32.mrf.mxu0
        %486 = vdwg.mxu0
        %v487 = vmax.f32 %v424, 0.0
        %v488 = vmax.f32 %v429, 0.0
        %v489 = vmax.f32 %v434, 0.0
        %v490 = vmax.f32 %v439, 0.0
        %v491 = vmax.f32 %v444, 0.0
        %v492 = vmax.f32 %v449, 0.0
        %v493 = vmax.f32 %v454, 0.0
        %v494 = vmax.f32 %v459, 0.0
        %v495 = vmax.f32 %v464, 0.0
        %v496 = vmax.f32 %v469, 0.0
        %v497 = vmax.f32 %v474, 0.0
        %v498 = vmax.f32 %v479, 0.0
        %v499 = vmax.f32 %v484, 0.0
        %v500 = vld [vmem:[%s3] sm:$0xff]
        %v501 = vld [vmem:[%s3 + $0x8] sm:$0xff]
        %v502 = vld [vmem:[%s3 + $0x10] sm:$0xff]
        %v503 = vld [vmem:[%s3 + $0x18] sm:$0xff]
        %v504 = vld [vmem:[%s3 + $0x20] sm:$0xff]
        %v505 = vld [vmem:[%s3 + $0x28] sm:$0xff]
        %v506 = vld [vmem:[%s3 + $0x30] sm:$0xff]
        %v507 = vld [vmem:[%s3 + $0x38] sm:$0xff]
        %v508 = vld [vmem:[%s3 + $0x40] sm:$0xff]
        %v509 = vld [vmem:[%s3 + $0x48] sm:$0xff]
        %v510 = vld [vmem:[%s3 + $0x50] sm:$0xff]
        %v511 = vld [vmem:[%s3 + $0x58] sm:$0xff]
        %v512 = vld [vmem:[%s3 + $0x60] sm:$0xff]
        %v513 = vld [vmem:[%s3 + $0x68] sm:$0xff]
        %v514 = vld [vmem:[%s3 + $0x70] sm:$0xff]
        %v515 = vld [vmem:[%s3 + $0x78] sm:$0xff]
        %v516 = vld [vmem:[%s4] sm:$0x1]
        %v518 = vlaneseq
        %v519 = vshrl.u32 %v518, 7
        %v520 = vsub.s32 0, %v519
        %v521 = vrot.slane %v516, %v520
        %523 = vmatprep.subr.mxu0 0.0
        %524 = vmatpush1.msra.mxu0 %v515
        %525 = vmatprep.subr.mxu0 0.0
        %526 = vmatpush1.msra.mxu0 %v514
        %527 = vmatprep.subr.mxu0 0.0
        %528 = vmatpush1.msra.mxu0 %v513
        %529 = vmatprep.subr.mxu0 0.0
        %530 = vmatpush1.msra.mxu0 %v512
        %531 = vmatprep.subr.mxu0 0.0
        %532 = vmatpush1.msra.mxu0 %v511
        %533 = vmatprep.subr.mxu0 0.0
        %534 = vmatpush1.msra.mxu0 %v510
        %535 = vmatprep.subr.mxu0 0.0
        %536 = vmatpush1.msra.mxu0 %v509
        %537 = vmatprep.subr.mxu0 0.0
        %538 = vmatpush1.msra.mxu0 %v508
        %539 = vmatprep.subr.mxu0 0.0
        %540 = vmatpush1.msra.mxu0 %v507
        %541 = vmatprep.subr.mxu0 0.0
        %542 = vmatpush1.msra.mxu0 %v506
        %543 = vmatprep.subr.mxu0 0.0
        %544 = vmatpush1.msra.mxu0 %v505
        %545 = vmatprep.subr.mxu0 0.0
        %546 = vmatpush1.msra.mxu0 %v504
        %547 = vmatprep.subr.mxu0 0.0
        %548 = vmatpush1.msra.mxu0 %v503
        %549 = vmatprep.subr.mxu0 0.0
        %550 = vmatpush1.msra.mxu0 %v502
        %551 = vmatprep.subr.mxu0 0.0
        %552 = vmatpush1.msra.mxu0 %v501
        %553 = vmatprep.subr.mxu0 0.0
        %554 = vmatpush1.msra.mxu0 %v500
        %555 = vmatprep.subr.mxu0 0.0
        %556 = vmatpush2.msra.mxu0 0.0
        %557 = vmatprep.subr.mxu0 0.0
        %558 = vmatpush2.msra.mxu0 0.0
        %559 = vmatprep.subr.mxu0 0.0
        %560 = vmatpush2.msra.mxu0 0.0
        %561 = vmatprep.subr.mxu0 0.0
        %562 = vmatpush2.msra.mxu0 0.0
        %563 = vmatprep.subr.mxu0 0.0
        %564 = vmatpush2.msra.mxu0 0.0
        %565 = vmatprep.subr.mxu0 0.0
        %566 = vmatpush2.msra.mxu0 0.0
        %567 = vmatprep.subr.mxu0 0.0
        %568 = vmatpush2.msra.mxu0 0.0
        %569 = vmatprep.subr.mxu0 0.0
        %570 = vmatpush2.msra.mxu0 0.0
        %571 = vmatprep.subr.mxu0 0.0
        %572 = vmatpush2.msra.mxu0 0.0
        %573 = vmatprep.subr.mxu0 0.0
        %574 = vmatpush2.msra.mxu0 0.0
        %575 = vmatprep.subr.mxu0 0.0
        %576 = vmatpush2.msra.mxu0 0.0
        %577 = vmatprep.subr.mxu0 0.0
        %578 = vmatpush2.msra.mxu0 0.0
        %579 = vmatprep.subr.mxu0 0.0
        %580 = vmatpush2.msra.mxu0 0.0
        %581 = vmatprep.subr.mxu0 0.0
        %582 = vmatpush2.msra.mxu0 0.0
        %583 = vmatprep.subr.mxu0 0.0
        %584 = vmatpush2.msra.mxu0 0.0
        %585 = vmatprep.subr.mxu0 0.0
        %586 = vmatpush2.msra.mxu0 0.0
        %587 = vmatprep.mubr.f32.mxu0 0.0
        %588 = vmatmul.mubr.f32.gmra.mxu0 %v487
        %v589 = vpop.f32.mrf.mxu0
        %v590 = vadd.f32 %v521, %v589
        %v591 = vpop.f32.mrf.mxu0
        %592 = vmatprep.mubr.f32.mxu0 0.0
        %593 = vmatmul.mubr.f32.gmra.mxu0 %v488
        %v594 = vpop.f32.mrf.mxu0
        %v595 = vadd.f32 %v521, %v594
        %v596 = vpop.f32.mrf.mxu0
        %597 = vmatprep.mubr.f32.mxu0 0.0
        %598 = vmatmul.mubr.f32.gmra.mxu0 %v489
        %v599 = vpop.f32.mrf.mxu0
        %v600 = vadd.f32 %v521, %v599
        %v601 = vpop.f32.mrf.mxu0
        %602 = vmatprep.mubr.f32.mxu0 0.0
        %603 = vmatmul.mubr.f32.gmra.mxu0 %v490
        %v604 = vpop.f32.mrf.mxu0
        %v605 = vadd.f32 %v521, %v604
        %v606 = vpop.f32.mrf.mxu0
        %607 = vmatprep.mubr.f32.mxu0 0.0
        %608 = vmatmul.mubr.f32.gmra.mxu0 %v491
        %v609 = vpop.f32.mrf.mxu0
        %v610 = vadd.f32 %v521, %v609
        %v611 = vpop.f32.mrf.mxu0
        %612 = vmatprep.mubr.f32.mxu0 0.0
        %613 = vmatmul.mubr.f32.gmra.mxu0 %v492
        %v614 = vpop.f32.mrf.mxu0
        %v615 = vadd.f32 %v521, %v614
        %v616 = vpop.f32.mrf.mxu0
        %617 = vmatprep.mubr.f32.mxu0 0.0
        %618 = vmatmul.mubr.f32.gmra.mxu0 %v493
        %v619 = vpop.f32.mrf.mxu0
        %v620 = vadd.f32 %v521, %v619
        %v621 = vpop.f32.mrf.mxu0
        %622 = vmatprep.mubr.f32.mxu0 0.0
        %623 = vmatmul.mubr.f32.gmra.mxu0 %v494
        %v624 = vpop.f32.mrf.mxu0
        %v625 = vadd.f32 %v521, %v624
        %v626 = vpop.f32.mrf.mxu0
        %627 = vmatprep.mubr.f32.mxu0 0.0
        %628 = vmatmul.mubr.f32.gmra.mxu0 %v495
        %v629 = vpop.f32.mrf.mxu0
        %v630 = vadd.f32 %v521, %v629
        %v631 = vpop.f32.mrf.mxu0
        %632 = vmatprep.mubr.f32.mxu0 0.0
        %633 = vmatmul.mubr.f32.gmra.mxu0 %v496
        %v634 = vpop.f32.mrf.mxu0
        %v635 = vadd.f32 %v521, %v634
        %v636 = vpop.f32.mrf.mxu0
        %637 = vmatprep.mubr.f32.mxu0 0.0
        %638 = vmatmul.mubr.f32.gmra.mxu0 %v497
        %v639 = vpop.f32.mrf.mxu0
        %v640 = vadd.f32 %v521, %v639
        %v641 = vpop.f32.mrf.mxu0
        %642 = vmatprep.mubr.f32.mxu0 0.0
        %643 = vmatmul.mubr.f32.gmra.mxu0 %v498
        %v644 = vpop.f32.mrf.mxu0
        %v645 = vadd.f32 %v521, %v644
        %v646 = vpop.f32.mrf.mxu0
        %647 = vmatprep.mubr.f32.mxu0 0.0
        %648 = vmatmul.mubr.f32.gmra.mxu0 %v499
        %v649 = vpop.f32.mrf.mxu0
        %v650 = vadd.f32 %v521, %v649
        %v651 = vpop.f32.mrf.mxu0
        %652 = vdwg.mxu0
        %v653 = vmax.f32 %v590, 0.0
        %v654 = vmax.f32 %v595, 0.0
        %v655 = vmax.f32 %v600, 0.0
        %v656 = vmax.f32 %v605, 0.0
        %v657 = vmax.f32 %v610, 0.0
        %v658 = vmax.f32 %v615, 0.0
        %v659 = vmax.f32 %v620, 0.0
        %v660 = vmax.f32 %v625, 0.0
        %v661 = vmax.f32 %v630, 0.0
        %v662 = vmax.f32 %v635, 0.0
        %v663 = vmax.f32 %v640, 0.0
        %v664 = vmax.f32 %v645, 0.0
        %v665 = vmax.f32 %v650, 0.0
        %v666 = vld [vmem:[#allocation2] sm:$0xff]
        %v667 = vld [vmem:[#allocation2 + $0x8] sm:$0xff]
        %v668 = vld [vmem:[#allocation2 + $0x10] sm:$0xff]
        %v669 = vld [vmem:[#allocation2 + $0x18] sm:$0xff]
        %v670 = vld [vmem:[#allocation2 + $0x20] sm:$0xff]
        %v671 = vld [vmem:[#allocation2 + $0x28] sm:$0xff]
        %v672 = vld [vmem:[#allocation2 + $0x30] sm:$0xff]
        %v673 = vld [vmem:[#allocation2 + $0x38] sm:$0xff]
        %v674 = vld [vmem:[#allocation2 + $0x40] sm:$0xff]
        %v675 = vld [vmem:[#allocation2 + $0x48] sm:$0xff]
        %v676 = vld [vmem:[#allocation2 + $0x50] sm:$0xff]
        %v677 = vld [vmem:[#allocation2 + $0x58] sm:$0xff]
        %v678 = vld [vmem:[#allocation2 + $0x60] sm:$0xff]
        %v679 = vld [vmem:[#allocation2 + $0x68] sm:$0xff]
        %v680 = vld [vmem:[#allocation2 + $0x70] sm:$0xff]
        %v681 = vld [vmem:[#allocation2 + $0x78] sm:$0xff]
        %v682 = vld [vmem:[%s6] sm:$0x1]
        %v684 = vlaneseq
        %v685 = vshrl.u32 %v684, 7
        %v686 = vsub.s32 0, %v685
        %v687 = vrot.slane %v682, %v686
        %689 = vmatprep.subr.mxu0 0.0
        %690 = vmatpush1.msra.mxu0 %v681
        %691 = vmatprep.subr.mxu0 0.0
        %692 = vmatpush1.msra.mxu0 %v680
        %693 = vmatprep.subr.mxu0 0.0
        %694 = vmatpush1.msra.mxu0 %v679
        %695 = vmatprep.subr.mxu0 0.0
        %696 = vmatpush1.msra.mxu0 %v678
        %697 = vmatprep.subr.mxu0 0.0
        %698 = vmatpush1.msra.mxu0 %v677
        %699 = vmatprep.subr.mxu0 0.0
        %700 = vmatpush1.msra.mxu0 %v676
        %701 = vmatprep.subr.mxu0 0.0
        %702 = vmatpush1.msra.mxu0 %v675
        %703 = vmatprep.subr.mxu0 0.0
        %704 = vmatpush1.msra.mxu0 %v674
        %705 = vmatprep.subr.mxu0 0.0
        %706 = vmatpush1.msra.mxu0 %v673
        %707 = vmatprep.subr.mxu0 0.0
        %708 = vmatpush1.msra.mxu0 %v672
        %709 = vmatprep.subr.mxu0 0.0
        %710 = vmatpush1.msra.mxu0 %v671
        %711 = vmatprep.subr.mxu0 0.0
        %712 = vmatpush1.msra.mxu0 %v670
        %713 = vmatprep.subr.mxu0 0.0
        %714 = vmatpush1.msra.mxu0 %v669
        %715 = vmatprep.subr.mxu0 0.0
        %716 = vmatpush1.msra.mxu0 %v668
        %717 = vmatprep.subr.mxu0 0.0
        %718 = vmatpush1.msra.mxu0 %v667
        %719 = vmatprep.subr.mxu0 0.0
        %720 = vmatpush1.msra.mxu0 %v666
        %721 = vmatprep.subr.mxu0 0.0
        %722 = vmatpush2.msra.mxu0 0.0
        %723 = vmatprep.subr.mxu0 0.0
        %724 = vmatpush2.msra.mxu0 0.0
        %725 = vmatprep.subr.mxu0 0.0
        %726 = vmatpush2.msra.mxu0 0.0
        %727 = vmatprep.subr.mxu0 0.0
        %728 = vmatpush2.msra.mxu0 0.0
        %729 = vmatprep.subr.mxu0 0.0
        %730 = vmatpush2.msra.mxu0 0.0
        %731 = vmatprep.subr.mxu0 0.0
        %732 = vmatpush2.msra.mxu0 0.0
        %733 = vmatprep.subr.mxu0 0.0
        %734 = vmatpush2.msra.mxu0 0.0
        %735 = vmatprep.subr.mxu0 0.0
        %736 = vmatpush2.msra.mxu0 0.0
        %737 = vmatprep.subr.mxu0 0.0
        %738 = vmatpush2.msra.mxu0 0.0
        %739 = vmatprep.subr.mxu0 0.0
        %740 = vmatpush2.msra.mxu0 0.0
        %741 = vmatprep.subr.mxu0 0.0
        %742 = vmatpush2.msra.mxu0 0.0
        %743 = vmatprep.subr.mxu0 0.0
        %744 = vmatpush2.msra.mxu0 0.0
        %745 = vmatprep.subr.mxu0 0.0
        %746 = vmatpush2.msra.mxu0 0.0
        %747 = vmatprep.subr.mxu0 0.0
        %748 = vmatpush2.msra.mxu0 0.0
        %749 = vmatprep.subr.mxu0 0.0
        %750 = vmatpush2.msra.mxu0 0.0
        %751 = vmatprep.subr.mxu0 0.0
        %752 = vmatpush2.msra.mxu0 0.0
        %753 = vmatprep.mubr.f32.mxu0 0.0
        %754 = vmatmul.mubr.f32.gmra.mxu0 %v653
        %v755 = vpop.f32.mrf.mxu0
        %v756 = vadd.f32 %v687, %v755
        %v757 = vpop.f32.mrf.mxu0
        %758 = vmatprep.mubr.f32.mxu0 0.0
        %759 = vmatmul.mubr.f32.gmra.mxu0 %v654
        %v760 = vpop.f32.mrf.mxu0
        %v761 = vadd.f32 %v687, %v760
        %v762 = vpop.f32.mrf.mxu0
        %763 = vmatprep.mubr.f32.mxu0 0.0
        %764 = vmatmul.mubr.f32.gmra.mxu0 %v655
        %v765 = vpop.f32.mrf.mxu0
        %v766 = vadd.f32 %v687, %v765
        %v767 = vpop.f32.mrf.mxu0
        %768 = vmatprep.mubr.f32.mxu0 0.0
        %769 = vmatmul.mubr.f32.gmra.mxu0 %v656
        %v770 = vpop.f32.mrf.mxu0
        %v771 = vadd.f32 %v687, %v770
        %v772 = vpop.f32.mrf.mxu0
        %773 = vmatprep.mubr.f32.mxu0 0.0
        %774 = vmatmul.mubr.f32.gmra.mxu0 %v657
        %v775 = vpop.f32.mrf.mxu0
        %v776 = vadd.f32 %v687, %v775
        %v777 = vpop.f32.mrf.mxu0
        %778 = vmatprep.mubr.f32.mxu0 0.0
        %779 = vmatmul.mubr.f32.gmra.mxu0 %v658
        %v780 = vpop.f32.mrf.mxu0
        %v781 = vadd.f32 %v687, %v780
        %v782 = vpop.f32.mrf.mxu0
        %783 = vmatprep.mubr.f32.mxu0 0.0
        %784 = vmatmul.mubr.f32.gmra.mxu0 %v659
        %v785 = vpop.f32.mrf.mxu0
        %v786 = vadd.f32 %v687, %v785
        %v787 = vpop.f32.mrf.mxu0
        %788 = vmatprep.mubr.f32.mxu0 0.0
        %789 = vmatmul.mubr.f32.gmra.mxu0 %v660
        %v790 = vpop.f32.mrf.mxu0
        %v791 = vadd.f32 %v687, %v790
        %v792 = vpop.f32.mrf.mxu0
        %793 = vmatprep.mubr.f32.mxu0 0.0
        %794 = vmatmul.mubr.f32.gmra.mxu0 %v661
        %v795 = vpop.f32.mrf.mxu0
        %v796 = vadd.f32 %v687, %v795
        %v797 = vpop.f32.mrf.mxu0
        %798 = vmatprep.mubr.f32.mxu0 0.0
        %799 = vmatmul.mubr.f32.gmra.mxu0 %v662
        %v800 = vpop.f32.mrf.mxu0
        %v801 = vadd.f32 %v687, %v800
        %v802 = vpop.f32.mrf.mxu0
        %803 = vmatprep.mubr.f32.mxu0 0.0
        %804 = vmatmul.mubr.f32.gmra.mxu0 %v663
        %v805 = vpop.f32.mrf.mxu0
        %v806 = vadd.f32 %v687, %v805
        %v807 = vpop.f32.mrf.mxu0
        %808 = vmatprep.mubr.f32.mxu0 0.0
        %809 = vmatmul.mubr.f32.gmra.mxu0 %v664
        %v810 = vpop.f32.mrf.mxu0
        %v811 = vadd.f32 %v687, %v810
        %v812 = vpop.f32.mrf.mxu0
        %813 = vmatprep.mubr.f32.mxu0 0.0
        %814 = vmatmul.mubr.f32.gmra.mxu0 %v665
        %v815 = vpop.f32.mrf.mxu0
        %v816 = vadd.f32 %v687, %v815
        %v817 = vpop.f32.mrf.mxu0
        %818 = vdwg.mxu0
        %v819 = vtanh.pop %v756
        %v820 = vtanh.pop %v761
        %v821 = vtanh.pop %v766
        %v822 = vtanh.pop %v771
        %v823 = vtanh.pop %v776
        %v824 = vtanh.pop %v781
        %v825 = vtanh.pop %v786
        %v826 = vtanh.pop %v791
        %v827 = vtanh.pop %v796
        %v828 = vtanh.pop %v801
        %v829 = vtanh.pop %v806
        %v830 = vtanh.pop %v811
        %v831 = vtanh.pop %v816
        %832 = vst [vmem:[%s287] sm:$0xff] %v819
        %833 = vst [vmem:[%s287 + $0x8] sm:$0xff] %v820
        %834 = vst [vmem:[%s287 + $0x10] sm:$0xff] %v821
        %835 = vst [vmem:[%s287 + $0x18] sm:$0xff] %v822
        %836 = vst [vmem:[%s287 + $0x20] sm:$0xff] %v823
        %837 = vst [vmem:[%s287 + $0x28] sm:$0xff] %v824
        %838 = vst [vmem:[%s287 + $0x30] sm:$0xff] %v825
        %839 = vst [vmem:[%s287 + $0x38] sm:$0xff] %v826
        %840 = vst [vmem:[%s287 + $0x40] sm:$0xff] %v827
        %841 = vst [vmem:[%s287 + $0x48] sm:$0xff] %v828
        %842 = vst [vmem:[%s287 + $0x50] sm:$0xff] %v829
        %843 = vst [vmem:[%s287 + $0x58] sm:$0xff] %v830
        %844 = vst [vmem:[%s287 + $0x60] sm:$0xff] %v831
        %s845 = sand.u32 %s182, 1
        %s846 = scalar_lea.sflag [#allocation4], %s845
        %s847 = sand.u32 %s182, 1
        %s848 = smul.addr %s847, 104
        %s849 = scalar_lea.vmem [#allocation5], %s848
        // Predicated region
        $region53: #{tpu_custom_call.1} parent=47 // pred_check
          %p850 = pneg %p192
        $region54: #{tpu_custom_call.1} parent=47 // pred_check_branch
          %852 = sbr.rel (%p850) target = $region56
        $region55: #{tpu_custom_call.1} parent=47 // pred_region
          %s853 = smul.u32 13, %s22
          %s855 = ssub.s32 1664, 1664
          %856 = vsyncadd %s846, %s855
          %s857 = smul.addr %s853, 128
          %s858 = scalar_lea.hbm %s7, %s857
          %s859 = sshll.u32 %s849, 4
          %s860 = int_to_ptr.vmem [resolvable:$true] %s859
          %865 = dma.vmem_to_hbm [thread:$0]  %s860, 1664, %s858, %s846, 128, 128, 8
        $region56: #{tpu_custom_call.1} parent=47 // pred_fallthru
          _
      $region48: #{tpu_custom_call.1} parent=5 // pred_fallthru
        _
      %p866 = scmp.le.s32.totalorder 2, %s17
      // Predicated region
      $region57: #{tpu_custom_call.1} parent=5 // pred_check
        %p867 = pneg %p866
      $region58: #{tpu_custom_call.1} parent=5 // pred_check_branch
        %869 = sbr.rel (%p867) target = $region60
      $region59: #{tpu_custom_call.1} parent=5 // pred_region
        %s870 = ssub.s32 %s17, 2
        // Predicated region
        $region61: #{tpu_custom_call.1} parent=59 // pred_check
          %p871 = pneg %p198
        $region62: #{tpu_custom_call.1} parent=59 // pred_check_branch
          %873 = sbr.rel (%p871) target = $region64
        $region63: #{tpu_custom_call.1} parent=59 // pred_region
          %s874 = sand.u32 %s183, 1
          %s875 = scalar_lea.sflag [#allocation4], %s874
          %s876 = sand.u32 %s183, 1
          %s877 = smul.addr %s876, 104
          %s878 = scalar_lea.vmem [#allocation5], %s877
          %879 = dma.done %s875, 1664
        $region64: #{tpu_custom_call.1} parent=59 // pred_fallthru
          _
      $region60: #{tpu_custom_call.1} parent=5 // pred_fallthru
        _
    $region6: #{tpu_custom_call.1} parent=1 // loop_footer
      %s21 = sadd.s32 1, %s17
    $region7: #{tpu_custom_call.1} parent=1 // loop_footer_branch
      %16 = sbr.rel target = $region3
    $region8: #{tpu_custom_call.1} parent=1 // loop_exit
      _
    %880 = vsyncpa [#allocation3], 1
    %s881 = scalar_lea.sflag [#allocation3], 1
    %882 = vsyncpa %s881, 1
    %883 = vsyncpa [#allocation4], 1
    %s884 = scalar_lea.sflag [#allocation4], 1
    %885 = vsyncpa %s884, 1

// kernel: tpu_custom_call.1
$region0: #{tpu_custom_call.1}
  #allocation0 [shape = 'u32[]', space=smem, size = 0x4, offset = 0x4, fixed_abs, tag = 'smem constant byte address 0x4 - core index']
  #allocation1 [shape = 'u32[144,128]{1,0:T(1,128)}', space=vmem, size = 0x12000, scoped, tag = 'internal scratch']
  %s0 = inlined_call_operand.vmem [shape: f32[208,16], index: 0, kind: input, shape index: {}]
  %s1 = inlined_call_operand.vmem [shape: f32[16,128], index: 1, kind: input, shape index: {}]
  %s2 = inlined_call_operand.vmem [shape: f32[1,128], index: 2, kind: input, shape index: {}]
  %s3 = inlined_call_operand.vmem [shape: f32[128,128], index: 3, kind: input, shape index: {}]
  %s4 = inlined_call_operand.vmem [shape: f32[1,128], index: 4, kind: input, shape index: {}]
  %s5 = inlined_call_operand.hbm [shape: f32[128,128], index: 5, kind: input, shape index: {}]
  %s6 = inlined_call_operand.vmem [shape: f32[1,128], index: 6, kind: input, shape index: {}]
  %s7 = inlined_call_operand.hbm [shape: f32[208,128], index: 7, kind: output, shape index: {}]
  %s8 = sld [smem:[#allocation0]]
  $region65: #{tpu_custom_call.1} parent=0
    _
  %s10 = ssub.s32 1, %s8
  %s11 = scalar_select 0, %s10, %s8
  $region1: #{tpu_custom_call.1} parent=0
    #allocation2 [shape = 'u8[65536]{0}', space=vmem, size = 0x10000, scoped, tag = 'input window, operand 5, single buffered']
    #allocation3 [shape = 's32[2]{0}', space=sflag, size = 0x8, scoped, tag = 'scoped memory for tpu_custom_call.1']
    #allocation4 [shape = 's32[2]{0}', space=sflag, size = 0x8, scoped, tag = 'scoped memory for tpu_custom_call.1']
    #allocation5 [shape = 'u8[106496]{0}', space=vmem, size = 0x1a000, scoped, tag = 'output window, operand 0']
    %12 = vsyncpa [#allocation3], 0
    %13 = vsyncpa [#allocation4], 0
    %s14 = scalar_lea.sflag [#allocation4], 1
    %15 = vsyncpa %s14, 0
    loop: start=0, step=1, limit=4
    $region2: #{tpu_custom_call.1} parent=1 // loop_pre_header
      _
    $region3: #{tpu_custom_call.1} parent=1 // loop_header
      %s17 = sphi 0, %s21
      %p18 = scmp.ge.s32.totalorder %s17, 4
      %s27 = sphi 0, %s29
      %s30 = sphi 0, %s27
      %s31 = sphi 0, %s30
      %s47 = sphi 0, %s31
      %s51 = sphi 0, %s51
      %s53 = sphi 0, %s51
      %s54 = sphi 0, %s53
      %s68 = sphi 0, %s54
      %s72 = sphi 0, %s72
      %s74 = sphi 0, %s72
      %s75 = sphi 0, %s74
      %s89 = sphi 0, %s75
      %s93 = sphi 0, %s93
      %s95 = sphi 0, %s93
      %s96 = sphi 0, %s95
      %s110 = sphi 0, %s96
      %s114 = sphi 0, %s114
      %s116 = sphi 0, %s114
      %s117 = sphi 0, %s116
      %s131 = sphi 0, %s117
      %s135 = sphi 0, %s135
      %s137 = sphi 0, %s135
      %s138 = sphi 0, %s137
      %s152 = sphi 0, %s138
      %s156 = sphi 0, %s156
      %s158 = sphi 0, %s156
      %s159 = sphi 0, %s158
      %s173 = sphi 0, %s159
      %s179 = sphi 0, %s181
      %s182 = sphi 0, %s179
      %s183 = sphi 0, %s182
      %s199 = sphi 0, %s183
    $region4: #{tpu_custom_call.1} parent=1 // loop_header_branch
      %20 = sbr.rel (%p18) target = $region8
    $region5: #{tpu_custom_call.1} parent=1 // loop_body
      %s22 = ssub.s32 %s17, 1
      %s23 = ssub.s32 %s17, 2
      %s24 = sadd.s32 %s17, 1
      %s25 = ssub.s32 %s17, %s24
      %p26 = scmp.eq.s32.totalorder %s25, 0
      %s28 = sadd.s32 %s27, 1
      %s29 = scalar_select %p26, %s27, %s28
      %p32 = pneg %p26
      %p33 = scmp.eq.s32.totalorder %s17, 1
      %p34 = por %p32, %p33
      %p35 = scmp.ne.s32.totalorder %s27, %s30
      %p36 = scmp.eq.s32.totalorder %s17, 0
      %p37 = por %p35, %p36
      %p38 = scmp.ne.s32.totalorder %s27, %s30
      %p39 = scmp.eq.s32.totalorder %s22, 1
      %p40 = por %p38, %p39
      %p41 = scmp.ne.s32.totalorder %s30, %s31
      %p42 = scmp.eq.s32.totalorder %s22, 0
      %p43 = por %p41, %p42
      %p44 = scmp.ne.s32.totalorder %s30, %s31
      %p45 = scmp.eq.s32.totalorder %s23, 1
      %p46 = por %p44, %p45
      %p48 = scmp.ne.s32.totalorder %s31, %s47
      %p49 = scmp.eq.s32.totalorder %s23, 0
      %p50 = por %p48, %p49
      %s52 = sadd.s32 %s51, 1
      %p55 = scmp.eq.s32.totalorder %s17, 1
      %p56 = scmp.ne.s32.totalorder %s51, %s53
      %p57 = scmp.eq.s32.totalorder %s17, 0
      %p58 = por %p56, %p57
      %p59 = scmp.ne.s32.totalorder %s51, %s53
      %p60 = scmp.eq.s32.totalorder %s22, 1
      %p61 = por %p59, %p60
      %p62 = scmp.ne.s32.totalorder %s53, %s54
      %p63 = scmp.eq.s32.totalorder %s22, 0
      %p64 = por %p62, %p63
      %p65 = scmp.ne.s32.totalorder %s53, %s54
      %p66 = scmp.eq.s32.totalorder %s23, 1
      %p67 = por %p65, %p66
      %p69 = scmp.ne.s32.totalorder %s54, %s68
      %p70 = scmp.eq.s32.totalorder %s23, 0
      %p71 = por %p69, %p70
      %s73 = sadd.s32 %s72, 1
      %p76 = scmp.eq.s32.totalorder %s17, 1
      %p77 = scmp.ne.s32.totalorder %s72, %s74
      %p78 = scmp.eq.s32.totalorder %s17, 0
      %p79 = por %p77, %p78
      %p80 = scmp.ne.s32.totalorder %s72, %s74
      %p81 = scmp.eq.s32.totalorder %s22, 1
      %p82 = por %p80, %p81
      %p83 = scmp.ne.s32.totalorder %s74, %s75
      %p84 = scmp.eq.s32.totalorder %s22, 0
      %p85 = por %p83, %p84
      %p86 = scmp.ne.s32.totalorder %s74, %s75
      %p87 = scmp.eq.s32.totalorder %s23, 1
      %p88 = por %p86, %p87
      %p90 = scmp.ne.s32.totalorder %s75, %s89
      %p91 = scmp.eq.s32.totalorder %s23, 0
      %p92 = por %p90, %p91
      %s94 = sadd.s32 %s93, 1
      %p97 = scmp.eq.s32.totalorder %s17, 1
      %p98 = scmp.ne.s32.totalorder %s93, %s95
      %p99 = scmp.eq.s32.totalorder %s17, 0
      %p100 = por %p98, %p99
      %p101 = scmp.ne.s32.totalorder %s93, %s95
      %p102 = scmp.eq.s32.totalorder %s22, 1
      %p103 = por %p101, %p102
      %p104 = scmp.ne.s32.totalorder %s95, %s96
      %p105 = scmp.eq.s32.totalorder %s22, 0
      %p106 = por %p104, %p105
      %p107 = scmp.ne.s32.totalorder %s95, %s96
      %p108 = scmp.eq.s32.totalorder %s23, 1
      %p109 = por %p107, %p108
      %p111 = scmp.ne.s32.totalorder %s96, %s110
      %p112 = scmp.eq.s32.totalorder %s23, 0
      %p113 = por %p111, %p112
      %s115 = sadd.s32 %s114, 1
      %p118 = scmp.eq.s32.totalorder %s17, 1
      %p119 = scmp.ne.s32.totalorder %s114, %s116
      %p120 = scmp.eq.s32.totalorder %s17, 0
      %p121 = por %p119, %p120
      %p122 = scmp.ne.s32.totalorder %s114, %s116
      %p123 = scmp.eq.s32.totalorder %s22, 1
      %p124 = por %p122, %p123
      %p125 = scmp.ne.s32.totalorder %s116, %s117
      %p126 = scmp.eq.s32.totalorder %s22, 0
      %p127 = por %p125, %p126
      %p128 = scmp.ne.s32.totalorder %s116, %s117
      %p129 = scmp.eq.s32.totalorder %s23, 1
      %p130 = por %p128, %p129
      %p132 = scmp.ne.s32.totalorder %s117, %s131
      %p133 = scmp.eq.s32.totalorder %s23, 0
      %p134 = por %p132, %p133
      %s136 = sadd.s32 %s135, 1
      %p139 = scmp.eq.s32.totalorder %s17, 1
      %p140 = scmp.ne.s32.totalorder %s135, %s137
      %p141 = scmp.eq.s32.totalorder %s17, 0
      %p142 = por %p140, %p141
      %p143 = scmp.ne.s32.totalorder %s135, %s137
      %p144 = scmp.eq.s32.totalorder %s22, 1
      %p145 = por %p143, %p144
      %p146 = scmp.ne.s32.totalorder %s137, %s138
      %p147 = scmp.eq.s32.totalorder %s22, 0
      %p148 = por %p146, %p147
      %p149 = scmp.ne.s32.totalorder %s137, %s138
      %p150 = scmp.eq.s32.totalorder %s23, 1
      %p151 = por %p149, %p150
      %p153 = scmp.ne.s32.totalorder %s138, %s152
      %p154 = scmp.eq.s32.totalorder %s23, 0
      %p155 = por %p153, %p154
      %s157 = sadd.s32 %s156, 1
      %p160 = scmp.eq.s32.totalorder %s17, 1
      %p161 = scmp.ne.s32.totalorder %s156, %s158
      %p162 = scmp.eq.s32.totalorder %s17, 0
      %p163 = por %p161, %p162
      %p164 = scmp.ne.s32.totalorder %s156, %s158
      %p165 = scmp.eq.s32.totalorder %s22, 1
      %p166 = por %p164, %p165
      %p167 = scmp.ne.s32.totalorder %s158, %s159
      %p168 = scmp.eq.s32.totalorder %s22, 0
      %p169 = por %p167, %p168
      %p170 = scmp.ne.s32.totalorder %s158, %s159
      %p171 = scmp.eq.s32.totalorder %s23, 1
      %p172 = por %p170, %p171
      %p174 = scmp.ne.s32.totalorder %s159, %s173
      %p175 = scmp.eq.s32.totalorder %s23, 0
      %p176 = por %p174, %p175
      %s177 = ssub.s32 %s17, %s24
      %p178 = scmp.eq.s32.totalorder %s177, 0
      %s180 = sadd.s32 %s179, 1
      %s181 = scalar_select %p178, %s179, %s180
      %p184 = pneg %p178
      %p185 = scmp.eq.s32.totalorder %s17, 1
      %p186 = por %p184, %p185
      %p187 = scmp.ne.s32.totalorder %s179, %s182
      %p188 = scmp.eq.s32.totalorder %s17, 0
      %p189 = por %p187, %p188
      %p190 = scmp.ne.s32.totalorder %s179, %s182
      %p191 = scmp.eq.s32.totalorder %s22, 1
      %p192 = por %p190, %p191
      %p193 = scmp.ne.s32.totalorder %s182, %s183
      %p194 = scmp.eq.s32.totalorder %s22, 0
      %p195 = por %p193, %p194
      %p196 = scmp.ne.s32.totalorder %s182, %s183
      %p197 = scmp.eq.s32.totalorder %s23, 1
      %p198 = por %p196, %p197
      %p200 = scmp.ne.s32.totalorder %s183, %s199
      %p201 = scmp.eq.s32.totalorder %s23, 0
      %p202 = por %p200, %p201
      %p203 = scmp.le.s32.totalorder 1, %s17
      %p204 = scmp.lt.s32.totalorder %s17, 3
      %p205 = pnand %p203, %p204
      %p206 = pneg %p205
      // Predicated region
      $region9: #{tpu_custom_call.1} parent=5 // pred_check
        _
      $region10: #{tpu_custom_call.1} parent=5 // pred_check_branch
        %208 = sbr.rel (%p205) target = $region12
      $region11: #{tpu_custom_call.1} parent=5 // pred_region
        %s209 = ssub.s32 %s17, 1
        // Predicated region
        $region13: #{tpu_custom_call.1} parent=11 // pred_check
          %p210 = pneg %p64
        $region14: #{tpu_custom_call.1} parent=11 // pred_check_branch
          %212 = sbr.rel (%p210) target = $region16
        $region15: #{tpu_custom_call.1} parent=11 // pred_region
          _
        $region16: #{tpu_custom_call.1} parent=11 // pred_fallthru
          _
        // Predicated region
        $region17: #{tpu_custom_call.1} parent=11 // pred_check
          %p213 = pneg %p85
        $region18: #{tpu_custom_call.1} parent=11 // pred_check_branch
          %215 = sbr.rel (%p213) target = $region20
        $region19: #{tpu_custom_call.1} parent=11 // pred_region
          _
        $region20: #{tpu_custom_call.1} parent=11 // pred_fallthru
          _
        // Predicated region
        $region21: #{tpu_custom_call.1} parent=11 // pred_check
          %p216 = pneg %p106
        $region22: #{tpu_custom_call.1} parent=11 // pred_check_branch
          %218 = sbr.rel (%p216) target = $region24
        $region23: #{tpu_custom_call.1} parent=11 // pred_region
          _
        $region24: #{tpu_custom_call.1} parent=11 // pred_fallthru
          _
        // Predicated region
        $region25: #{tpu_custom_call.1} parent=11 // pred_check
          %p219 = pneg %p127
        $region26: #{tpu_custom_call.1} parent=11 // pred_check_branch
          %221 = sbr.rel (%p219) target = $region28
        $region27: #{tpu_custom_call.1} parent=11 // pred_region
          _
        $region28: #{tpu_custom_call.1} parent=11 // pred_fallthru
          _
        // Predicated region
        $region29: #{tpu_custom_call.1} parent=11 // pred_check
          %p222 = pneg %p148
        $region30: #{tpu_custom_call.1} parent=11 // pred_check_branch
          %224 = sbr.rel (%p222) target = $region32
        $region31: #{tpu_custom_call.1} parent=11 // pred_region
          %s226 = ssub.s32 2048, 2048
          %227 = vsyncadd [#allocation3], %s226
          %s228 = sshll.u32 [#allocation2], 4
          %s229 = int_to_ptr.vmem [resolvable:$true] %s228
          %234 = dma.hbm_to_vmem [thread:$0]  %s5, 2048, %s229, [#allocation3], 128, 128, 8
        $region32: #{tpu_custom_call.1} parent=11 // pred_fallthru
          _
        // Predicated region
        $region33: #{tpu_custom_call.1} parent=11 // pred_check
          %p235 = pneg %p169
        $region34: #{tpu_custom_call.1} parent=11 // pred_check_branch
          %237 = sbr.rel (%p235) target = $region36
        $region35: #{tpu_custom_call.1} parent=11 // pred_region
          _
        $region36: #{tpu_custom_call.1} parent=11 // pred_fallthru
          _
      $region12: #{tpu_custom_call.1} parent=5 // pred_fallthru
        _
      %p238 = scmp.lt.s32.totalorder %s17, 2
      // Predicated region
      $region37: #{tpu_custom_call.1} parent=5 // pred_check
        %p239 = pneg %p238
      $region38: #{tpu_custom_call.1} parent=5 // pred_check_branch
        %241 = sbr.rel (%p239) target = $region40
      $region39: #{tpu_custom_call.1} parent=5 // pred_region
        // Predicated region
        $region41: #{tpu_custom_call.1} parent=39 // pred_check
          %p242 = pneg %p37
        $region42: #{tpu_custom_call.1} parent=39 // pred_check_branch
          %244 = sbr.rel (%p242) target = $region44
        $region43: #{tpu_custom_call.1} parent=39 // pred_region
          %s245 = smul.u32 13, %s17
          %p246 = scmp.lt.s32.totalorder %s245, 25
          %s247 = scalar_select %p246, %s245, 25
          %s248 = smul.addr %s247, 8
          %s249 = scalar_lea.vmem %s0, %s248
          %s250 = smul.u32 13, %s17
        $region44: #{tpu_custom_call.1} parent=39 // pred_fallthru
          _
      $region40: #{tpu_custom_call.1} parent=5 // pred_fallthru
        _
      %p251 = scmp.le.s32.totalorder 1, %s17
      %p252 = scmp.lt.s32.totalorder %s17, 3
      %p253 = pnand %p251, %p252
      %p254 = pneg %p253
      // Predicated region
      $region45: #{tpu_custom_call.1} parent=5 // pred_check
        _
      $region46: #{tpu_custom_call.1} parent=5 // pred_check_branch
        %256 = sbr.rel (%p253) target = $region48
      $region47: #{tpu_custom_call.1} parent=5 // pred_region
        %s257 = ssub.s32 %s17, 1
        // Predicated region
        $region49: #{tpu_custom_call.1} parent=47 // pred_check
          %p258 = pneg %p148
        $region50: #{tpu_custom_call.1} parent=47 // pred_check_branch
          %260 = sbr.rel (%p258) target = $region52
        $region51: #{tpu_custom_call.1} parent=47 // pred_region
          %261 = dma.done [#allocation3], 2048
        $region52: #{tpu_custom_call.1} parent=47 // pred_fallthru
          _
        %s262 = smul.u32 13, %s22
        %p263 = scmp.lt.s32.totalorder %s262, 25
        %s264 = scalar_select %p263, %s262, 25
        %s265 = smul.addr %s264, 8
        %s266 = scalar_lea.vmem %s0, %s265
        %p267 = pneg %p43
        %p268 = pneg %p40
        %p269 = pneg %p64
        %p270 = pneg %p61
        %p271 = pneg %p85
        %p272 = pneg %p82
        %p273 = pneg %p106
        %p274 = pneg %p103
        %p275 = pneg %p127
        %p276 = pneg %p124
        %p277 = pneg %p148
        %p278 = pneg %p145
        %p279 = pneg %p169
        %p280 = pneg %p166
        %p281 = pneg %p195
        %p282 = pneg %p192
        %s283 = sand.u32 %s182, 1
        %s284 = scalar_lea.sflag [#allocation4], %s283
        %s285 = sand.u32 %s182, 1
        %s286 = smul.addr %s285, 104
        %s287 = scalar_lea.vmem [#allocation5], %s286
        %s288 = smul.u32 13, %s22
        %p289 = scmp.lt.s32.totalorder %s288, 25
        %s290 = scalar_select %p289, %s288, 25
        %s291 = smul.addr %s290, 8
        %s292 = scalar_lea.vmem %s0, %s291
        %s293 = smul.u32 13, %s22
        %s294 = smul.u32 13, %s22
        %v295 = vld [vmem:[%s292] sm:$0xff]
        %v296 = vld [vmem:[%s292 + $0x8] sm:$0xff]
        %v297 = vld [vmem:[%s292 + $0x10] sm:$0xff]
        %v298 = vld [vmem:[%s292 + $0x18] sm:$0xff]
        %v299 = vld [vmem:[%s292 + $0x20] sm:$0xff]
        %v300 = vld [vmem:[%s292 + $0x28] sm:$0xff]
        %v301 = vld [vmem:[%s292 + $0x30] sm:$0xff]
        %v302 = vld [vmem:[%s292 + $0x38] sm:$0xff]
        %v303 = vld [vmem:[%s292 + $0x40] sm:$0xff]
        %v304 = vld [vmem:[%s292 + $0x48] sm:$0xff]
        %v305 = vld [vmem:[%s292 + $0x50] sm:$0xff]
        %v306 = vld [vmem:[%s292 + $0x58] sm:$0xff]
        %v307 = vld [vmem:[%s292 + $0x60] sm:$0xff]
        %v308 = vld [vmem:[%s1] sm:$0xff]
        %v309 = vld [vmem:[%s1 + $0x8] sm:$0xff]
        %v310 = vld [vmem:[%s2] sm:$0x1]
        %v312 = vlaneseq
        %v313 = vshrl.u32 %v312, 7
        %v314 = vsub.s32 0, %v313
        %v315 = vrot.slane %v310, %v314
        %vm317 = vcmask 130048
        %v319 = vsel %vm317, %v295, 0
        %v322 = vsel %vm317, %v296, 0
        %v325 = vsel %vm317, %v297, 0
        %v328 = vsel %vm317, %v298, 0
        %v331 = vsel %vm317, %v299, 0
        %v334 = vsel %vm317, %v300, 0
        %v337 = vsel %vm317, %v301, 0
        %v340 = vsel %vm317, %v302, 0
        %v343 = vsel %vm317, %v303, 0
        %v346 = vsel %vm317, %v304, 0
        %v349 = vsel %vm317, %v305, 0
        %v352 = vsel %vm317, %v306, 0
        %v355 = vsel %vm317, %v307, 0
        %357 = vmatprep.subr.mxu0 0.0
        %358 = vmatpush1.msra.mxu0 0.0
        %359 = vmatprep.subr.mxu0 0.0
        %360 = vmatpush1.msra.mxu0 0.0
        %361 = vmatprep.subr.mxu0 0.0
        %362 = vmatpush1.msra.mxu0 0.0
        %363 = vmatprep.subr.mxu0 0.0
        %364 = vmatpush1.msra.mxu0 0.0
        %365 = vmatprep.subr.mxu0 0.0
        %366 = vmatpush1.msra.mxu0 0.0
        %367 = vmatprep.subr.mxu0 0.0
        %368 = vmatpush1.msra.mxu0 0.0
        %369 = vmatprep.subr.mxu0 0.0
        %370 = vmatpush1.msra.mxu0 0.0
        %371 = vmatprep.subr.mxu0 0.0
        %372 = vmatpush1.msra.mxu0 0.0
        %373 = vmatprep.subr.mxu0 0.0
        %374 = vmatpush1.msra.mxu0 0.0
        %375 = vmatprep.subr.mxu0 0.0
        %376 = vmatpush1.msra.mxu0 0.0
        %377 = vmatprep.subr.mxu0 0.0
        %378 = vmatpush1.msra.mxu0 0.0
        %379 = vmatprep.subr.mxu0 0.0
        %380 = vmatpush1.msra.mxu0 0.0
        %381 = vmatprep.subr.mxu0 0.0
        %382 = vmatpush1.msra.mxu0 0.0
        %383 = vmatprep.subr.mxu0 0.0
        %384 = vmatpush1.msra.mxu0 0.0
        %385 = vmatprep.subr.mxu0 0.0
        %386 = vmatpush1.msra.mxu0 %v309
        %387 = vmatprep.subr.mxu0 0.0
        %388 = vmatpush1.msra.mxu0 %v308
        %389 = vmatprep.subr.mxu0 0.0
        %390 = vmatpush2.msra.mxu0 0.0
        %391 = vmatprep.subr.mxu0 0.0
        %392 = vmatpush2.msra.mxu0 0.0
        %393 = vmatprep.subr.mxu0 0.0
        %394 = vmatpush2.msra.mxu0 0.0
        %395 = vmatprep.subr.mxu0 0.0
        %396 = vmatpush2.msra.mxu0 0.0
        %397 = vmatprep.subr.mxu0 0.0
        %398 = vmatpush2.msra.mxu0 0.0
        %399 = vmatprep.subr.mxu0 0.0
        %400 = vmatpush2.msra.mxu0 0.0
        %401 = vmatprep.subr.mxu0 0.0
        %402 = vmatpush2.msra.mxu0 0.0
        %403 = vmatprep.subr.mxu0 0.0
        %404 = vmatpush2.msra.mxu0 0.0
        %405 = vmatprep.subr.mxu0 0.0
        %406 = vmatpush2.msra.mxu0 0.0
        %407 = vmatprep.subr.mxu0 0.0
        %408 = vmatpush2.msra.mxu0 0.0
        %409 = vmatprep.subr.mxu0 0.0
        %410 = vmatpush2.msra.mxu0 0.0
        %411 = vmatprep.subr.mxu0 0.0
        %412 = vmatpush2.msra.mxu0 0.0
        %413 = vmatprep.subr.mxu0 0.0
        %414 = vmatpush2.msra.mxu0 0.0
        %415 = vmatprep.subr.mxu0 0.0
        %416 = vmatpush2.msra.mxu0 0.0
        %417 = vmatprep.subr.mxu0 0.0
        %418 = vmatpush2.msra.mxu0 0.0
        %419 = vmatprep.subr.mxu0 0.0
        %420 = vmatpush2.msra.mxu0 0.0
        %421 = vmatprep.mubr.f32.mxu0 0.0
        %422 = vmatmul.mubr.f32.gmra.mxu0 %v319
        %v423 = vpop.f32.mrf.mxu0
        %v424 = vadd.f32 %v315, %v423
        %v425 = vpop.f32.mrf.mxu0
        %426 = vmatprep.mubr.f32.mxu0 0.0
        %427 = vmatmul.mubr.f32.gmra.mxu0 %v322
        %v428 = vpop.f32.mrf.mxu0
        %v429 = vadd.f32 %v315, %v428
        %v430 = vpop.f32.mrf.mxu0
        %431 = vmatprep.mubr.f32.mxu0 0.0
        %432 = vmatmul.mubr.f32.gmra.mxu0 %v325
        %v433 = vpop.f32.mrf.mxu0
        %v434 = vadd.f32 %v315, %v433
        %v435 = vpop.f32.mrf.mxu0
        %436 = vmatprep.mubr.f32.mxu0 0.0
        %437 = vmatmul.mubr.f32.gmra.mxu0 %v328
        %v438 = vpop.f32.mrf.mxu0
        %v439 = vadd.f32 %v315, %v438
        %v440 = vpop.f32.mrf.mxu0
        %441 = vmatprep.mubr.f32.mxu0 0.0
        %442 = vmatmul.mubr.f32.gmra.mxu0 %v331
        %v443 = vpop.f32.mrf.mxu0
        %v444 = vadd.f32 %v315, %v443
        %v445 = vpop.f32.mrf.mxu0
        %446 = vmatprep.mubr.f32.mxu0 0.0
        %447 = vmatmul.mubr.f32.gmra.mxu0 %v334
        %v448 = vpop.f32.mrf.mxu0
        %v449 = vadd.f32 %v315, %v448
        %v450 = vpop.f32.mrf.mxu0
        %451 = vmatprep.mubr.f32.mxu0 0.0
        %452 = vmatmul.mubr.f32.gmra.mxu0 %v337
        %v453 = vpop.f32.mrf.mxu0
        %v454 = vadd.f32 %v315, %v453
        %v455 = vpop.f32.mrf.mxu0
        %456 = vmatprep.mubr.f32.mxu0 0.0
        %457 = vmatmul.mubr.f32.gmra.mxu0 %v340
        %v458 = vpop.f32.mrf.mxu0
        %v459 = vadd.f32 %v315, %v458
        %v460 = vpop.f32.mrf.mxu0
        %461 = vmatprep.mubr.f32.mxu0 0.0
        %462 = vmatmul.mubr.f32.gmra.mxu0 %v343
        %v463 = vpop.f32.mrf.mxu0
        %v464 = vadd.f32 %v315, %v463
        %v465 = vpop.f32.mrf.mxu0
        %466 = vmatprep.mubr.f32.mxu0 0.0
        %467 = vmatmul.mubr.f32.gmra.mxu0 %v346
        %v468 = vpop.f32.mrf.mxu0
        %v469 = vadd.f32 %v315, %v468
        %v470 = vpop.f32.mrf.mxu0
        %471 = vmatprep.mubr.f32.mxu0 0.0
        %472 = vmatmul.mubr.f32.gmra.mxu0 %v349
        %v473 = vpop.f32.mrf.mxu0
        %v474 = vadd.f32 %v315, %v473
        %v475 = vpop.f32.mrf.mxu0
        %476 = vmatprep.mubr.f32.mxu0 0.0
        %477 = vmatmul.mubr.f32.gmra.mxu0 %v352
        %v478 = vpop.f32.mrf.mxu0
        %v479 = vadd.f32 %v315, %v478
        %v480 = vpop.f32.mrf.mxu0
        %481 = vmatprep.mubr.f32.mxu0 0.0
        %482 = vmatmul.mubr.f32.gmra.mxu0 %v355
        %v483 = vpop.f32.mrf.mxu0
        %v484 = vadd.f32 %v315, %v483
        %v485 = vpop.f32.mrf.mxu0
        %486 = vdwg.mxu0
        %v487 = vmax.f32 %v424, 0.0
        %v488 = vmax.f32 %v429, 0.0
        %v489 = vmax.f32 %v434, 0.0
        %v490 = vmax.f32 %v439, 0.0
        %v491 = vmax.f32 %v444, 0.0
        %v492 = vmax.f32 %v449, 0.0
        %v493 = vmax.f32 %v454, 0.0
        %v494 = vmax.f32 %v459, 0.0
        %v495 = vmax.f32 %v464, 0.0
        %v496 = vmax.f32 %v469, 0.0
        %v497 = vmax.f32 %v474, 0.0
        %v498 = vmax.f32 %v479, 0.0
        %v499 = vmax.f32 %v484, 0.0
        %v500 = vld [vmem:[%s3] sm:$0xff]
        %v501 = vld [vmem:[%s3 + $0x8] sm:$0xff]
        %v502 = vld [vmem:[%s3 + $0x10] sm:$0xff]
        %v503 = vld [vmem:[%s3 + $0x18] sm:$0xff]
        %v504 = vld [vmem:[%s3 + $0x20] sm:$0xff]
        %v505 = vld [vmem:[%s3 + $0x28] sm:$0xff]
        %v506 = vld [vmem:[%s3 + $0x30] sm:$0xff]
        %v507 = vld [vmem:[%s3 + $0x38] sm:$0xff]
        %v508 = vld [vmem:[%s3 + $0x40] sm:$0xff]
        %v509 = vld [vmem:[%s3 + $0x48] sm:$0xff]
        %v510 = vld [vmem:[%s3 + $0x50] sm:$0xff]
        %v511 = vld [vmem:[%s3 + $0x58] sm:$0xff]
        %v512 = vld [vmem:[%s3 + $0x60] sm:$0xff]
        %v513 = vld [vmem:[%s3 + $0x68] sm:$0xff]
        %v514 = vld [vmem:[%s3 + $0x70] sm:$0xff]
        %v515 = vld [vmem:[%s3 + $0x78] sm:$0xff]
        %v516 = vld [vmem:[%s4] sm:$0x1]
        %v518 = vlaneseq
        %v519 = vshrl.u32 %v518, 7
        %v520 = vsub.s32 0, %v519
        %v521 = vrot.slane %v516, %v520
        %523 = vmatprep.subr.mxu0 0.0
        %524 = vmatpush1.msra.mxu0 %v515
        %525 = vmatprep.subr.mxu0 0.0
        %526 = vmatpush1.msra.mxu0 %v514
        %527 = vmatprep.subr.mxu0 0.0
        %528 = vmatpush1.msra.mxu0 %v513
        %529 = vmatprep.subr.mxu0 0.0
        %530 = vmatpush1.msra.mxu0 %v512
        %531 = vmatprep.subr.mxu0 0.0
        %532 = vmatpush1.msra.mxu0 %v511
        %533 = vmatprep.subr.mxu0 0.0
        %534 = vmatpush1.msra.mxu0 %v510
        %535 = vmatprep.subr.mxu0 0.0
        %536 = vmatpush1.msra.mxu0 %v509
        %537 = vmatprep.subr.mxu0 0.0
        %538 = vmatpush1.msra.mxu0 %v508
        %539 = vmatprep.subr.mxu0 0.0
        %540 = vmatpush1.msra.mxu0 %v507
        %541 = vmatprep.subr.mxu0 0.0
        %542 = vmatpush1.msra.mxu0 %v506
        %543 = vmatprep.subr.mxu0 0.0
        %544 = vmatpush1.msra.mxu0 %v505
        %545 = vmatprep.subr.mxu0 0.0
        %546 = vmatpush1.msra.mxu0 %v504
        %547 = vmatprep.subr.mxu0 0.0
        %548 = vmatpush1.msra.mxu0 %v503
        %549 = vmatprep.subr.mxu0 0.0
        %550 = vmatpush1.msra.mxu0 %v502
        %551 = vmatprep.subr.mxu0 0.0
        %552 = vmatpush1.msra.mxu0 %v501
        %553 = vmatprep.subr.mxu0 0.0
        %554 = vmatpush1.msra.mxu0 %v500
        %555 = vmatprep.subr.mxu0 0.0
        %556 = vmatpush2.msra.mxu0 0.0
        %557 = vmatprep.subr.mxu0 0.0
        %558 = vmatpush2.msra.mxu0 0.0
        %559 = vmatprep.subr.mxu0 0.0
        %560 = vmatpush2.msra.mxu0 0.0
        %561 = vmatprep.subr.mxu0 0.0
        %562 = vmatpush2.msra.mxu0 0.0
        %563 = vmatprep.subr.mxu0 0.0
        %564 = vmatpush2.msra.mxu0 0.0
        %565 = vmatprep.subr.mxu0 0.0
        %566 = vmatpush2.msra.mxu0 0.0
        %567 = vmatprep.subr.mxu0 0.0
        %568 = vmatpush2.msra.mxu0 0.0
        %569 = vmatprep.subr.mxu0 0.0
        %570 = vmatpush2.msra.mxu0 0.0
        %571 = vmatprep.subr.mxu0 0.0
        %572 = vmatpush2.msra.mxu0 0.0
        %573 = vmatprep.subr.mxu0 0.0
        %574 = vmatpush2.msra.mxu0 0.0
        %575 = vmatprep.subr.mxu0 0.0
        %576 = vmatpush2.msra.mxu0 0.0
        %577 = vmatprep.subr.mxu0 0.0
        %578 = vmatpush2.msra.mxu0 0.0
        %579 = vmatprep.subr.mxu0 0.0
        %580 = vmatpush2.msra.mxu0 0.0
        %581 = vmatprep.subr.mxu0 0.0
        %582 = vmatpush2.msra.mxu0 0.0
        %583 = vmatprep.subr.mxu0 0.0
        %584 = vmatpush2.msra.mxu0 0.0
        %585 = vmatprep.subr.mxu0 0.0
        %586 = vmatpush2.msra.mxu0 0.0
        %587 = vmatprep.mubr.f32.mxu0 0.0
        %588 = vmatmul.mubr.f32.gmra.mxu0 %v487
        %v589 = vpop.f32.mrf.mxu0
        %v590 = vadd.f32 %v521, %v589
        %v591 = vpop.f32.mrf.mxu0
        %592 = vmatprep.mubr.f32.mxu0 0.0
        %593 = vmatmul.mubr.f32.gmra.mxu0 %v488
        %v594 = vpop.f32.mrf.mxu0
        %v595 = vadd.f32 %v521, %v594
        %v596 = vpop.f32.mrf.mxu0
        %597 = vmatprep.mubr.f32.mxu0 0.0
        %598 = vmatmul.mubr.f32.gmra.mxu0 %v489
        %v599 = vpop.f32.mrf.mxu0
        %v600 = vadd.f32 %v521, %v599
        %v601 = vpop.f32.mrf.mxu0
        %602 = vmatprep.mubr.f32.mxu0 0.0
        %603 = vmatmul.mubr.f32.gmra.mxu0 %v490
        %v604 = vpop.f32.mrf.mxu0
        %v605 = vadd.f32 %v521, %v604
        %v606 = vpop.f32.mrf.mxu0
        %607 = vmatprep.mubr.f32.mxu0 0.0
        %608 = vmatmul.mubr.f32.gmra.mxu0 %v491
        %v609 = vpop.f32.mrf.mxu0
        %v610 = vadd.f32 %v521, %v609
        %v611 = vpop.f32.mrf.mxu0
        %612 = vmatprep.mubr.f32.mxu0 0.0
        %613 = vmatmul.mubr.f32.gmra.mxu0 %v492
        %v614 = vpop.f32.mrf.mxu0
        %v615 = vadd.f32 %v521, %v614
        %v616 = vpop.f32.mrf.mxu0
        %617 = vmatprep.mubr.f32.mxu0 0.0
        %618 = vmatmul.mubr.f32.gmra.mxu0 %v493
        %v619 = vpop.f32.mrf.mxu0
        %v620 = vadd.f32 %v521, %v619
        %v621 = vpop.f32.mrf.mxu0
        %622 = vmatprep.mubr.f32.mxu0 0.0
        %623 = vmatmul.mubr.f32.gmra.mxu0 %v494
        %v624 = vpop.f32.mrf.mxu0
        %v625 = vadd.f32 %v521, %v624
        %v626 = vpop.f32.mrf.mxu0
        %627 = vmatprep.mubr.f32.mxu0 0.0
        %628 = vmatmul.mubr.f32.gmra.mxu0 %v495
        %v629 = vpop.f32.mrf.mxu0
        %v630 = vadd.f32 %v521, %v629
        %v631 = vpop.f32.mrf.mxu0
        %632 = vmatprep.mubr.f32.mxu0 0.0
        %633 = vmatmul.mubr.f32.gmra.mxu0 %v496
        %v634 = vpop.f32.mrf.mxu0
        %v635 = vadd.f32 %v521, %v634
        %v636 = vpop.f32.mrf.mxu0
        %637 = vmatprep.mubr.f32.mxu0 0.0
        %638 = vmatmul.mubr.f32.gmra.mxu0 %v497
        %v639 = vpop.f32.mrf.mxu0
        %v640 = vadd.f32 %v521, %v639
        %v641 = vpop.f32.mrf.mxu0
        %642 = vmatprep.mubr.f32.mxu0 0.0
        %643 = vmatmul.mubr.f32.gmra.mxu0 %v498
        %v644 = vpop.f32.mrf.mxu0
        %v645 = vadd.f32 %v521, %v644
        %v646 = vpop.f32.mrf.mxu0
        %647 = vmatprep.mubr.f32.mxu0 0.0
        %648 = vmatmul.mubr.f32.gmra.mxu0 %v499
        %v649 = vpop.f32.mrf.mxu0
        %v650 = vadd.f32 %v521, %v649
        %v651 = vpop.f32.mrf.mxu0
        %652 = vdwg.mxu0
        %v653 = vmax.f32 %v590, 0.0
        %v654 = vmax.f32 %v595, 0.0
        %v655 = vmax.f32 %v600, 0.0
        %v656 = vmax.f32 %v605, 0.0
        %v657 = vmax.f32 %v610, 0.0
        %v658 = vmax.f32 %v615, 0.0
        %v659 = vmax.f32 %v620, 0.0
        %v660 = vmax.f32 %v625, 0.0
        %v661 = vmax.f32 %v630, 0.0
        %v662 = vmax.f32 %v635, 0.0
        %v663 = vmax.f32 %v640, 0.0
        %v664 = vmax.f32 %v645, 0.0
        %v665 = vmax.f32 %v650, 0.0
        %v666 = vld [vmem:[#allocation2] sm:$0xff]
        %v667 = vld [vmem:[#allocation2 + $0x8] sm:$0xff]
        %v668 = vld [vmem:[#allocation2 + $0x10] sm:$0xff]
        %v669 = vld [vmem:[#allocation2 + $0x18] sm:$0xff]
        %v670 = vld [vmem:[#allocation2 + $0x20] sm:$0xff]
        %v671 = vld [vmem:[#allocation2 + $0x28] sm:$0xff]
        %v672 = vld [vmem:[#allocation2 + $0x30] sm:$0xff]
        %v673 = vld [vmem:[#allocation2 + $0x38] sm:$0xff]
        %v674 = vld [vmem:[#allocation2 + $0x40] sm:$0xff]
        %v675 = vld [vmem:[#allocation2 + $0x48] sm:$0xff]
        %v676 = vld [vmem:[#allocation2 + $0x50] sm:$0xff]
        %v677 = vld [vmem:[#allocation2 + $0x58] sm:$0xff]
        %v678 = vld [vmem:[#allocation2 + $0x60] sm:$0xff]
        %v679 = vld [vmem:[#allocation2 + $0x68] sm:$0xff]
        %v680 = vld [vmem:[#allocation2 + $0x70] sm:$0xff]
        %v681 = vld [vmem:[#allocation2 + $0x78] sm:$0xff]
        %v682 = vld [vmem:[%s6] sm:$0x1]
        %v684 = vlaneseq
        %v685 = vshrl.u32 %v684, 7
        %v686 = vsub.s32 0, %v685
        %v687 = vrot.slane %v682, %v686
        %689 = vmatprep.subr.mxu0 0.0
        %690 = vmatpush1.msra.mxu0 %v681
        %691 = vmatprep.subr.mxu0 0.0
        %692 = vmatpush1.msra.mxu0 %v680
        %693 = vmatprep.subr.mxu0 0.0
        %694 = vmatpush1.msra.mxu0 %v679
        %695 = vmatprep.subr.mxu0 0.0
        %696 = vmatpush1.msra.mxu0 %v678
        %697 = vmatprep.subr.mxu0 0.0
        %698 = vmatpush1.msra.mxu0 %v677
        %699 = vmatprep.subr.mxu0 0.0
        %700 = vmatpush1.msra.mxu0 %v676
        %701 = vmatprep.subr.mxu0 0.0
        %702 = vmatpush1.msra.mxu0 %v675
        %703 = vmatprep.subr.mxu0 0.0
        %704 = vmatpush1.msra.mxu0 %v674
        %705 = vmatprep.subr.mxu0 0.0
        %706 = vmatpush1.msra.mxu0 %v673
        %707 = vmatprep.subr.mxu0 0.0
        %708 = vmatpush1.msra.mxu0 %v672
        %709 = vmatprep.subr.mxu0 0.0
        %710 = vmatpush1.msra.mxu0 %v671
        %711 = vmatprep.subr.mxu0 0.0
        %712 = vmatpush1.msra.mxu0 %v670
        %713 = vmatprep.subr.mxu0 0.0
        %714 = vmatpush1.msra.mxu0 %v669
        %715 = vmatprep.subr.mxu0 0.0
        %716 = vmatpush1.msra.mxu0 %v668
        %717 = vmatprep.subr.mxu0 0.0
        %718 = vmatpush1.msra.mxu0 %v667
        %719 = vmatprep.subr.mxu0 0.0
        %720 = vmatpush1.msra.mxu0 %v666
        %721 = vmatprep.subr.mxu0 0.0
        %722 = vmatpush2.msra.mxu0 0.0
        %723 = vmatprep.subr.mxu0 0.0
        %724 = vmatpush2.msra.mxu0 0.0
        %725 = vmatprep.subr.mxu0 0.0
        %726 = vmatpush2.msra.mxu0 0.0
        %727 = vmatprep.subr.mxu0 0.0
        %728 = vmatpush2.msra.mxu0 0.0
        %729 = vmatprep.subr.mxu0 0.0
        %730 = vmatpush2.msra.mxu0 0.0
        %731 = vmatprep.subr.mxu0 0.0
        %732 = vmatpush2.msra.mxu0 0.0
        %733 = vmatprep.subr.mxu0 0.0
        %734 = vmatpush2.msra.mxu0 0.0
        %735 = vmatprep.subr.mxu0 0.0
        %736 = vmatpush2.msra.mxu0 0.0
        %737 = vmatprep.subr.mxu0 0.0
        %738 = vmatpush2.msra.mxu0 0.0
        %739 = vmatprep.subr.mxu0 0.0
        %740 = vmatpush2.msra.mxu0 0.0
        %741 = vmatprep.subr.mxu0 0.0
        %742 = vmatpush2.msra.mxu0 0.0
        %743 = vmatprep.subr.mxu0 0.0
        %744 = vmatpush2.msra.mxu0 0.0
        %745 = vmatprep.subr.mxu0 0.0
        %746 = vmatpush2.msra.mxu0 0.0
        %747 = vmatprep.subr.mxu0 0.0
        %748 = vmatpush2.msra.mxu0 0.0
        %749 = vmatprep.subr.mxu0 0.0
        %750 = vmatpush2.msra.mxu0 0.0
        %751 = vmatprep.subr.mxu0 0.0
        %752 = vmatpush2.msra.mxu0 0.0
        %753 = vmatprep.mubr.f32.mxu0 0.0
        %754 = vmatmul.mubr.f32.gmra.mxu0 %v653
        %v755 = vpop.f32.mrf.mxu0
        %v756 = vadd.f32 %v687, %v755
        %v757 = vpop.f32.mrf.mxu0
        %758 = vmatprep.mubr.f32.mxu0 0.0
        %759 = vmatmul.mubr.f32.gmra.mxu0 %v654
        %v760 = vpop.f32.mrf.mxu0
        %v761 = vadd.f32 %v687, %v760
        %v762 = vpop.f32.mrf.mxu0
        %763 = vmatprep.mubr.f32.mxu0 0.0
        %764 = vmatmul.mubr.f32.gmra.mxu0 %v655
        %v765 = vpop.f32.mrf.mxu0
        %v766 = vadd.f32 %v687, %v765
        %v767 = vpop.f32.mrf.mxu0
        %768 = vmatprep.mubr.f32.mxu0 0.0
        %769 = vmatmul.mubr.f32.gmra.mxu0 %v656
        %v770 = vpop.f32.mrf.mxu0
        %v771 = vadd.f32 %v687, %v770
        %v772 = vpop.f32.mrf.mxu0
        %773 = vmatprep.mubr.f32.mxu0 0.0
        %774 = vmatmul.mubr.f32.gmra.mxu0 %v657
        %v775 = vpop.f32.mrf.mxu0
        %v776 = vadd.f32 %v687, %v775
        %v777 = vpop.f32.mrf.mxu0
        %778 = vmatprep.mubr.f32.mxu0 0.0
        %779 = vmatmul.mubr.f32.gmra.mxu0 %v658
        %v780 = vpop.f32.mrf.mxu0
        %v781 = vadd.f32 %v687, %v780
        %v782 = vpop.f32.mrf.mxu0
        %783 = vmatprep.mubr.f32.mxu0 0.0
        %784 = vmatmul.mubr.f32.gmra.mxu0 %v659
        %v785 = vpop.f32.mrf.mxu0
        %v786 = vadd.f32 %v687, %v785
        %v787 = vpop.f32.mrf.mxu0
        %788 = vmatprep.mubr.f32.mxu0 0.0
        %789 = vmatmul.mubr.f32.gmra.mxu0 %v660
        %v790 = vpop.f32.mrf.mxu0
        %v791 = vadd.f32 %v687, %v790
        %v792 = vpop.f32.mrf.mxu0
        %793 = vmatprep.mubr.f32.mxu0 0.0
        %794 = vmatmul.mubr.f32.gmra.mxu0 %v661
        %v795 = vpop.f32.mrf.mxu0
        %v796 = vadd.f32 %v687, %v795
        %v797 = vpop.f32.mrf.mxu0
        %798 = vmatprep.mubr.f32.mxu0 0.0
        %799 = vmatmul.mubr.f32.gmra.mxu0 %v662
        %v800 = vpop.f32.mrf.mxu0
        %v801 = vadd.f32 %v687, %v800
        %v802 = vpop.f32.mrf.mxu0
        %803 = vmatprep.mubr.f32.mxu0 0.0
        %804 = vmatmul.mubr.f32.gmra.mxu0 %v663
        %v805 = vpop.f32.mrf.mxu0
        %v806 = vadd.f32 %v687, %v805
        %v807 = vpop.f32.mrf.mxu0
        %808 = vmatprep.mubr.f32.mxu0 0.0
        %809 = vmatmul.mubr.f32.gmra.mxu0 %v664
        %v810 = vpop.f32.mrf.mxu0
        %v811 = vadd.f32 %v687, %v810
        %v812 = vpop.f32.mrf.mxu0
        %813 = vmatprep.mubr.f32.mxu0 0.0
        %814 = vmatmul.mubr.f32.gmra.mxu0 %v665
        %v815 = vpop.f32.mrf.mxu0
        %v816 = vadd.f32 %v687, %v815
        %v817 = vpop.f32.mrf.mxu0
        %818 = vdwg.mxu0
        %v819 = vtanh.pop %v756
        %v820 = vtanh.pop %v761
        %v821 = vtanh.pop %v766
        %v822 = vtanh.pop %v771
        %v823 = vtanh.pop %v776
        %v824 = vtanh.pop %v781
        %v825 = vtanh.pop %v786
        %v826 = vtanh.pop %v791
        %v827 = vtanh.pop %v796
        %v828 = vtanh.pop %v801
        %v829 = vtanh.pop %v806
        %v830 = vtanh.pop %v811
        %v831 = vtanh.pop %v816
        %832 = vst [vmem:[%s287] sm:$0xff] %v819
        %833 = vst [vmem:[%s287 + $0x8] sm:$0xff] %v820
        %834 = vst [vmem:[%s287 + $0x10] sm:$0xff] %v821
        %835 = vst [vmem:[%s287 + $0x18] sm:$0xff] %v822
        %836 = vst [vmem:[%s287 + $0x20] sm:$0xff] %v823
        %837 = vst [vmem:[%s287 + $0x28] sm:$0xff] %v824
        %838 = vst [vmem:[%s287 + $0x30] sm:$0xff] %v825
        %839 = vst [vmem:[%s287 + $0x38] sm:$0xff] %v826
        %840 = vst [vmem:[%s287 + $0x40] sm:$0xff] %v827
        %841 = vst [vmem:[%s287 + $0x48] sm:$0xff] %v828
        %842 = vst [vmem:[%s287 + $0x50] sm:$0xff] %v829
        %843 = vst [vmem:[%s287 + $0x58] sm:$0xff] %v830
        %844 = vst [vmem:[%s287 + $0x60] sm:$0xff] %v831
        %s845 = sand.u32 %s182, 1
        %s846 = scalar_lea.sflag [#allocation4], %s845
        %s847 = sand.u32 %s182, 1
        %s848 = smul.addr %s847, 104
        %s849 = scalar_lea.vmem [#allocation5], %s848
        // Predicated region
        $region53: #{tpu_custom_call.1} parent=47 // pred_check
          %p850 = pneg %p192
        $region54: #{tpu_custom_call.1} parent=47 // pred_check_branch
          %852 = sbr.rel (%p850) target = $region56
        $region55: #{tpu_custom_call.1} parent=47 // pred_region
          %s853 = smul.u32 13, %s22
          %s855 = ssub.s32 1664, 1664
          %856 = vsyncadd %s846, %s855
          %s857 = smul.addr %s853, 128
          %s858 = scalar_lea.hbm %s7, %s857
          %s859 = sshll.u32 %s849, 4
          %s860 = int_to_ptr.vmem [resolvable:$true] %s859
          %865 = dma.vmem_to_hbm [thread:$0]  %s860, 1664, %s858, %s846, 128, 128, 8
        $region56: #{tpu_custom_call.1} parent=47 // pred_fallthru
          _
      $region48: #{tpu_custom_call.1} parent=5 // pred_fallthru
        _
      %p866 = scmp.le.s32.totalorder 2, %s17
      // Predicated region
      $region57: #{tpu_custom_call.1} parent=5 // pred_check
        %p867 = pneg %p866
      $region58: #{tpu_custom_call.1} parent=5 // pred_check_branch
        %869 = sbr.rel (%p867) target = $region60
      $region59: #{tpu_custom_call.1} parent=5 // pred_region
        %s870 = ssub.s32 %s17, 2
        // Predicated region
        $region61: #{tpu_custom_call.1} parent=59 // pred_check
          %p871 = pneg %p198
        $region62: #{tpu_custom_call.1} parent=59 // pred_check_branch
          %873 = sbr.rel (%p871) target = $region64
        $region63: #{tpu_custom_call.1} parent=59 // pred_region
          %s874 = sand.u32 %s183, 1
          %s875 = scalar_lea.sflag [#allocation4], %s874
          %s876 = sand.u32 %s183, 1
          %s877 = smul.addr %s876, 104
          %s878 = scalar_lea.vmem [#allocation5], %s877
          %879 = dma.done %s875, 1664
        $region64: #{tpu_custom_call.1} parent=59 // pred_fallthru
          _
      $region60: #{tpu_custom_call.1} parent=5 // pred_fallthru
        _
    $region6: #{tpu_custom_call.1} parent=1 // loop_footer
      %s21 = sadd.s32 1, %s17
    $region7: #{tpu_custom_call.1} parent=1 // loop_footer_branch
      %16 = sbr.rel target = $region3
    $region8: #{tpu_custom_call.1} parent=1 // loop_exit
      _
    %880 = vsyncpa [#allocation3], 1
    %s881 = scalar_lea.sflag [#allocation3], 1
    %882 = vsyncpa %s881, 1
    %883 = vsyncpa [#allocation4], 1
    %s884 = scalar_lea.sflag [#allocation4], 1
    %885 = vsyncpa %s884, 1

</llo_original>
